<compile_context>
chip_gen: v7x
topology: tpu7x:2x2x1
jax: 0.10.0
libtpu: 0.0.40
codegen_flags: <defaults>
</compile_context>

<pallas_src>
import functools

import jax
import jax.numpy as jnp
from jax import lax
from jax.experimental import pallas as pl
from jax.experimental.pallas import tpu as pltpu


def _sab_kernel(x_ref, mask_ref, w1_ref, b1_ref, w2_ref, b2_ref,
                wdu1_ref, bdu1_ref, wdu2_ref, bdu2_ref,
                o_ref, col_ref, *, H, W, C, K, res_scale):
    # x_ref:    (C, H*W)       one batch element (NCHW flattened over space)
    # mask_ref: (K*K, H*W)     {0,1} validity mask per conv tap (emulates zero padding)
    # w1_ref, w2_ref: (C, K*K*C)  im2col conv weights (Cout, KH*KW*Cin)
    # b1_ref, b2_ref: (C, 1)
    # wdu1_ref: (C, Cmid)  bdu1_ref: (1, Cmid)   squeeze 1x1 conv (transposed)
    # wdu2_ref: (C, Cmid)  bdu2_ref: (C, 1)      excite 1x1 conv
    # o_ref:    (C, H*W)       lane-dense output block
    # col_ref:  (K*K*C, H*W)   VMEM scratch: im2col buffer shared by both convs
    HW = H * W
    P = K // 2

    def im2col(src):
        # col[(kh*K + kw)*C + ci, p] = src[ci, p + (kh-P)*W + (kw-P)]  (0 off-image).
        # The spatial shift is a lane roll (XLU) of the (C, H*W) slab; wrapped /
        # out-of-image lanes are zeroed by the precomputed tap mask.
        for kh in range(K):
            for kw in range(K):
                j = kh * K + kw
                delta = (kh - P) * W + (kw - P)
                shifted = src if delta == 0 else pltpu.roll(
                    src, shift=(-delta) % HW, axis=1)
                col_ref[j * C:(j + 1) * C, :] = shifted * mask_ref[j:j + 1, :]

    x = x_ref[...]                                                    # (C, HW)

    # ---- conv1 (3x3 same) + bias + ReLU: one big MXU contraction (K=9*C, N=HW) ----
    im2col(x)
    h1 = jnp.dot(w1_ref[...], col_ref[...], preferred_element_type=jnp.float32)
    h1 = jnp.maximum(h1 + b1_ref[...], 0.0)

    # ---- conv2 (3x3 same) + bias ----
    im2col(h1)
    h2 = jnp.dot(w2_ref[...], col_ref[...], preferred_element_type=jnp.float32)
    h2 = h2 + b2_ref[...]

    # ---- channel attention (C -> C//16 -> C on pooled vector): tiny, VPU/XLU only ----
    pool = jnp.mean(h2, axis=1, keepdims=True)                        # (C, 1)
    y1 = jnp.sum(wdu1_ref[...] * pool, axis=0, keepdims=True)         # (1, Cmid)
    y1 = jnp.maximum(y1 + bdu1_ref[...], 0.0)
    y2 = jnp.sum(wdu2_ref[...] * y1, axis=1, keepdims=True)           # (C, 1)
    gate = jax.nn.sigmoid(y2 + bdu2_ref[...]) * res_scale             # (C, 1)

    # ---- gated residual, lane-dense store ----
    o_ref[...] = (h2 * gate + x).astype(o_ref.dtype)


def spectral_attention_res_block(x_nchw, w1, b1, w2, b2, wdu1, bdu1, wdu2, bdu2,
                                 *, res_scale=1.0):
    n, c, h, w = x_nchw.shape
    cout, cin, k, _ = w1.shape
    assert cout == c and cin == c
    p = k // 2
    hw = h * w
    cmid = wdu1.shape[0]
    # TODO(synk): pad H*W up to a multiple of 128 for odd spatial sizes; the demo shapes
    # already satisfy this so no padding path is implemented.
    assert hw % 128 == 0 and c % 8 == 0

    # ---- plain-JAX glue: free reshape (no transpose) + parameter repacking ----
    x2d = x_nchw.reshape(n, c, hw)

    def conv_w_mat(wt):  # (Cout, Cin, K, K) -> (Cout, K*K*Cin); taps kh-major, kw, ci
        return jnp.transpose(wt, (0, 2, 3, 1)).reshape(c, k * k * c)

    w1m, w2m = conv_w_mat(w1), conv_w_mat(w2)
    b1c, b2c = b1.reshape(c, 1), b2.reshape(c, 1)
    wdu1m = wdu1.reshape(cmid, c).T            # (C, Cmid)
    bdu1r = bdu1.reshape(1, cmid)
    wdu2m = wdu2.reshape(c, cmid)              # (C, Cmid)
    bdu2c = bdu2.reshape(c, 1)

    # {0,1} validity mask per conv tap: replaces zero padding after the lane roll.
    hh = jnp.arange(hw, dtype=jnp.int32) // w
    ww = jnp.arange(hw, dtype=jnp.int32) % w
    masks = []
    for kh in range(k):
        for kw in range(k):
            dh, dw = kh - p, kw - p
            masks.append((hh + dh >= 0) & (hh + dh < h)
                         & (ww + dw >= 0) & (ww + dw < w))
    mask = jnp.stack(masks).astype(x_nchw.dtype)             # (K*K, H*W)

    kernel = functools.partial(_sab_kernel, H=h, W=w, C=c, K=k,
                               res_scale=float(res_scale))

    flops = n * (2 * 2 * c * (k * k * c) * hw + 8 * c * hw)
    bytes_accessed = 4 * (2 * n * c * hw + k * k * hw + 2 * c * k * k * c
                          + 4 * c + 2 * cmid * c + cmid)

    out = pl.pallas_call(
        kernel,
        out_shape=jax.ShapeDtypeStruct((n, c, hw), x_nchw.dtype),
        grid_spec=pltpu.PrefetchScalarGridSpec(
            num_scalar_prefetch=0,
            grid=(n,),                       # batch-parallel: feeds both v7x TensorCores
            in_specs=[
                pl.BlockSpec((None, c, hw), lambda i: (i, 0, 0)),      # x slab
                pl.BlockSpec((k * k, hw), lambda i: (0, 0)),           # tap masks
                pl.BlockSpec((c, k * k * c), lambda i: (0, 0)),        # conv1 weight
                pl.BlockSpec((c, 1), lambda i: (0, 0)),                # conv1 bias
                pl.BlockSpec((c, k * k * c), lambda i: (0, 0)),        # conv2 weight
                pl.BlockSpec((c, 1), lambda i: (0, 0)),                # conv2 bias
                pl.BlockSpec((c, cmid), lambda i: (0, 0)),             # CA squeeze w^T
                pl.BlockSpec((1, cmid), lambda i: (0, 0)),             # CA squeeze b
                pl.BlockSpec((c, cmid), lambda i: (0, 0)),             # CA excite w
                pl.BlockSpec((c, 1), lambda i: (0, 0)),                # CA excite b
            ],
            out_specs=pl.BlockSpec((None, c, hw), lambda i: (i, 0, 0)),
            scratch_shapes=[
                # shared im2col buffer (~288 KB f32 at C=32, 16x16) -- tiny vs. the
                # 32 MiB scoped VMEM default on all of v5e/v6e/v7x.
                pltpu.VMEM((k * k * c, hw), jnp.float32),
            ],
        ),
        compiler_params=pltpu.CompilerParams(
            dimension_semantics=("parallel",)),
        cost_estimate=pl.CostEstimate(flops=flops, transcendentals=n * c,
                                      bytes_accessed=bytes_accessed),
    )(x2d, mask, w1m, b1c, w2m, b2c, wdu1m, bdu1r, wdu2m, bdu2c)

    return out.reshape(n, c, h, w)


def _reference(x, w1, b1, w2, b2, wdu1, bdu1, wdu2, bdu2, res_scale):
    """Plain-JAX reference for validation only."""
    dn = ("NCHW", "OIHW", "NCHW")
    k = w1.shape[-1]
    pad = ((k // 2, k // 2), (k // 2, k // 2))
    hi = lax.Precision.HIGHEST
    h = lax.conv_general_dilated(x, w1, (1, 1), pad, dimension_numbers=dn,
                                 precision=hi) + b1.reshape(1, -1, 1, 1)
    h = jnp.maximum(h, 0.0)
    h = lax.conv_general_dilated(h, w2, (1, 1), pad, dimension_numbers=dn,
                                 precision=hi) + b2.reshape(1, -1, 1, 1)
    cmid, c = wdu1.shape[0], wdu1.shape[1]
    pool = jnp.mean(h, axis=(2, 3), keepdims=True)
    y1 = jnp.maximum(jnp.einsum("ncij,dc->ndij", pool, wdu1.reshape(cmid, c),
                                precision=hi) + bdu1.reshape(1, -1, 1, 1), 0.0)
    gate = jax.nn.sigmoid(jnp.einsum("ndij,cd->ncij", y1, wdu2.reshape(c, cmid),
                                     precision=hi) + bdu2.reshape(1, -1, 1, 1))
    return h * gate * res_scale + x


if __name__ == "__main__":
    key = jax.random.PRNGKey(0)
    ks = jax.random.split(key, 9)

    N, C, H, W, K = 2, 32, 16, 16, 3        # in_feats=32 -> CALayer squeeze width 32//16=2
    CMID = C // 16
    RES_SCALE = 1.0

    x = jax.random.normal(ks[0], (N, C, H, W), jnp.float32)
    bnd = 1.0 / (C * K * K) ** 0.5
    w1 = jax.random.uniform(ks[1], (C, C, K, K), jnp.float32, -bnd, bnd)
    b1 = jax.random.uniform(ks[2], (C,), jnp.float32, -bnd, bnd)
    w2 = jax.random.uniform(ks[3], (C, C, K, K), jnp.float32, -bnd, bnd)
    b2 = jax.random.uniform(ks[4], (C,), jnp.float32, -bnd, bnd)
    bd = 1.0 / C ** 0.5
    wdu1 = jax.random.uniform(ks[5], (CMID, C, 1, 1), jnp.float32, -bd, bd)
    bdu1 = jax.random.uniform(ks[6], (CMID,), jnp.float32, -bd, bd)
    be = 1.0 / CMID ** 0.5
    wdu2 = jax.random.uniform(ks[7], (C, CMID, 1, 1), jnp.float32, -be, be)
    bdu2 = jax.random.uniform(ks[8], (C,), jnp.float32, -be, be)

    y = spectral_attention_res_block(x, w1, b1, w2, b2, wdu1, bdu1, wdu2, bdu2,
                                     res_scale=RES_SCALE)
    y = jax.block_until_ready(y)

    y_ref = _reference(x, w1, b1, w2, b2, wdu1, bdu1, wdu2, bdu2, RES_SCALE)
    assert y.shape == (N, C, H, W), y.shape
    err = float(jnp.max(jnp.abs(y - y_ref)))
    assert jnp.allclose(y, y_ref, atol=1e-4, rtol=1e-4), err

    print("KERNEL_OK")
</pallas_src>

<mosaic_0001>
module attributes {stable_mosaic.version = 11 : i64} {
  func.func @_sab_kernel(%arg0: i32, %arg1: memref<1x32x256xf32, #tpu.memory_space<vmem>>, %arg2: memref<9x256xf32, #tpu.memory_space<vmem>>, %arg3: memref<32x288xf32, #tpu.memory_space<vmem>>, %arg4: memref<32x1xf32, #tpu.memory_space<vmem>>, %arg5: memref<32x288xf32, #tpu.memory_space<vmem>>, %arg6: memref<32x1xf32, #tpu.memory_space<vmem>>, %arg7: memref<32x2xf32, #tpu.memory_space<vmem>>, %arg8: memref<1x2xf32, #tpu.memory_space<vmem>>, %arg9: memref<32x2xf32, #tpu.memory_space<vmem>>, %arg10: memref<32x1xf32, #tpu.memory_space<vmem>>, %arg11: memref<1x32x256xf32, #tpu.memory_space<vmem>>, %arg12: memref<288x256xf32, #tpu.memory_space<vmem>>) attributes {dimension_semantics = [#tpu.dimension_semantics<parallel>], iteration_bounds = array<i64: 2>, scalar_prefetch = 0 : i64, scratch_operands = 1 : i64, tpu.core_type = #tpu.core_type<tc>, window_params = [{transform_indices = @transform_0, window_bounds = array<i64: 1, 32, 256>}, {pipeline_mode = #tpu.pipeline_mode<synchronous>, transform_indices = @transform_1, window_bounds = array<i64: 9, 256>}, {pipeline_mode = #tpu.pipeline_mode<synchronous>, transform_indices = @transform_2, window_bounds = array<i64: 32, 288>}, {pipeline_mode = #tpu.pipeline_mode<synchronous>, transform_indices = @transform_3, window_bounds = array<i64: 32, 1>}, {pipeline_mode = #tpu.pipeline_mode<synchronous>, transform_indices = @transform_4, window_bounds = array<i64: 32, 288>}, {pipeline_mode = #tpu.pipeline_mode<synchronous>, transform_indices = @transform_5, window_bounds = array<i64: 32, 1>}, {pipeline_mode = #tpu.pipeline_mode<synchronous>, transform_indices = @transform_6, window_bounds = array<i64: 32, 2>}, {pipeline_mode = #tpu.pipeline_mode<synchronous>, transform_indices = @transform_7, window_bounds = array<i64: 1, 2>}, {pipeline_mode = #tpu.pipeline_mode<synchronous>, transform_indices = @transform_8, window_bounds = array<i64: 32, 2>}, {pipeline_mode = #tpu.pipeline_mode<synchronous>, transform_indices = @transform_9, window_bounds = array<i64: 32, 1>}, {transform_indices = @transform_10, window_bounds = array<i64: 1, 32, 256>}]} {
    %c0 = arith.constant 0 : index
    %c0_0 = arith.constant 0 : index
    %c0_1 = arith.constant 0 : index
    %0 = vector.load %arg1[%c0, %c0_0, %c0_1] : memref<1x32x256xf32, #tpu.memory_space<vmem>>, vector<1x32x256xf32>
    %1 = vector.shape_cast %0 : vector<1x32x256xf32> to vector<32x256xf32>
    %c17_i32 = arith.constant 17 : i32
    %2 = tpu.dynamic_rotate %1 by %c17_i32 dim 1 : vector<32x256xf32>, i32 -> vector<32x256xf32>
    %c0_2 = arith.constant 0 : index
    %c0_3 = arith.constant 0 : index
    %3 = vector.load %arg2[%c0_2, %c0_3] : memref<9x256xf32, #tpu.memory_space<vmem>>, vector<1x256xf32>
    %4 = vector.broadcast %3 : vector<1x256xf32> to vector<32x256xf32>
    %5 = arith.mulf %2, %4 : vector<32x256xf32>
    %c0_4 = arith.constant 0 : index
    %c0_5 = arith.constant 0 : index
    %6 = vector.load %arg12[%c0_4, %c0_5] : memref<288x256xf32, #tpu.memory_space<vmem>>, vector<32x256xf32>
    tpu.vector_store %arg12[%c0_4, %c0_5], %5 {strides = array<i32>} : memref<288x256xf32, #tpu.memory_space<vmem>>, vector<32x256xf32>,
    %c16_i32 = arith.constant 16 : i32
    %7 = tpu.dynamic_rotate %1 by %c16_i32 dim 1 : vector<32x256xf32>, i32 -> vector<32x256xf32>
    %c1 = arith.constant 1 : index
    %c0_6 = arith.constant 0 : index
    %8 = vector.load %arg2[%c1, %c0_6] : memref<9x256xf32, #tpu.memory_space<vmem>>, vector<1x256xf32>
    %9 = vector.broadcast %8 : vector<1x256xf32> to vector<32x256xf32>
    %10 = arith.mulf %7, %9 : vector<32x256xf32>
    %c32 = arith.constant 32 : index
    %c0_7 = arith.constant 0 : index
    %11 = vector.load %arg12[%c32, %c0_7] : memref<288x256xf32, #tpu.memory_space<vmem>>, vector<32x256xf32>
    tpu.vector_store %arg12[%c32, %c0_7], %10 {strides = array<i32>} : memref<288x256xf32, #tpu.memory_space<vmem>>, vector<32x256xf32>,
    %c15_i32 = arith.constant 15 : i32
    %12 = tpu.dynamic_rotate %1 by %c15_i32 dim 1 : vector<32x256xf32>, i32 -> vector<32x256xf32>
    %c2 = arith.constant 2 : index
    %c0_8 = arith.constant 0 : index
    %13 = vector.load %arg2[%c2, %c0_8] : memref<9x256xf32, #tpu.memory_space<vmem>>, vector<1x256xf32>
    %14 = vector.broadcast %13 : vector<1x256xf32> to vector<32x256xf32>
    %15 = arith.mulf %12, %14 : vector<32x256xf32>
    %c64 = arith.constant 64 : index
    %c0_9 = arith.constant 0 : index
    %16 = vector.load %arg12[%c64, %c0_9] : memref<288x256xf32, #tpu.memory_space<vmem>>, vector<32x256xf32>
    tpu.vector_store %arg12[%c64, %c0_9], %15 {strides = array<i32>} : memref<288x256xf32, #tpu.memory_space<vmem>>, vector<32x256xf32>,
    %c1_i32 = arith.constant 1 : i32
    %17 = tpu.dynamic_rotate %1 by %c1_i32 dim 1 : vector<32x256xf32>, i32 -> vector<32x256xf32>
    %c3 = arith.constant 3 : index
    %c0_10 = arith.constant 0 : index
    %18 = vector.load %arg2[%c3, %c0_10] : memref<9x256xf32, #tpu.memory_space<vmem>>, vector<1x256xf32>
    %19 = vector.broadcast %18 : vector<1x256xf32> to vector<32x256xf32>
    %20 = arith.mulf %17, %19 : vector<32x256xf32>
    %c96 = arith.constant 96 : index
    %c0_11 = arith.constant 0 : index
    %21 = vector.load %arg12[%c96, %c0_11] : memref<288x256xf32, #tpu.memory_space<vmem>>, vector<32x256xf32>
    tpu.vector_store %arg12[%c96, %c0_11], %20 {strides = array<i32>} : memref<288x256xf32, #tpu.memory_space<vmem>>, vector<32x256xf32>,
    %c4 = arith.constant 4 : index
    %c0_12 = arith.constant 0 : index
    %22 = vector.load %arg2[%c4, %c0_12] : memref<9x256xf32, #tpu.memory_space<vmem>>, vector<1x256xf32>
    %23 = vector.broadcast %22 : vector<1x256xf32> to vector<32x256xf32>
    %24 = arith.mulf %1, %23 : vector<32x256xf32>
    %c128 = arith.constant 128 : index
    %c0_13 = arith.constant 0 : index
    %25 = vector.load %arg12[%c128, %c0_13] : memref<288x256xf32, #tpu.memory_space<vmem>>, vector<32x256xf32>
    tpu.vector_store %arg12[%c128, %c0_13], %24 {strides = array<i32>} : memref<288x256xf32, #tpu.memory_space<vmem>>, vector<32x256xf32>,
    %c255_i32 = arith.constant 255 : i32
    %26 = tpu.dynamic_rotate %1 by %c255_i32 dim 1 : vector<32x256xf32>, i32 -> vector<32x256xf32>
    %c5 = arith.constant 5 : index
    %c0_14 = arith.constant 0 : index
    %27 = vector.load %arg2[%c5, %c0_14] : memref<9x256xf32, #tpu.memory_space<vmem>>, vector<1x256xf32>
    %28 = vector.broadcast %27 : vector<1x256xf32> to vector<32x256xf32>
    %29 = arith.mulf %26, %28 : vector<32x256xf32>
    %c160 = arith.constant 160 : index
    %c0_15 = arith.constant 0 : index
    %30 = vector.load %arg12[%c160, %c0_15] : memref<288x256xf32, #tpu.memory_space<vmem>>, vector<32x256xf32>
    tpu.vector_store %arg12[%c160, %c0_15], %29 {strides = array<i32>} : memref<288x256xf32, #tpu.memory_space<vmem>>, vector<32x256xf32>,
    %c241_i32 = arith.constant 241 : i32
    %31 = tpu.dynamic_rotate %1 by %c241_i32 dim 1 : vector<32x256xf32>, i32 -> vector<32x256xf32>
    %c6 = arith.constant 6 : index
    %c0_16 = arith.constant 0 : index
    %32 = vector.load %arg2[%c6, %c0_16] : memref<9x256xf32, #tpu.memory_space<vmem>>, vector<1x256xf32>
    %33 = vector.broadcast %32 : vector<1x256xf32> to vector<32x256xf32>
    %34 = arith.mulf %31, %33 : vector<32x256xf32>
    %c192 = arith.constant 192 : index
    %c0_17 = arith.constant 0 : index
    %35 = vector.load %arg12[%c192, %c0_17] : memref<288x256xf32, #tpu.memory_space<vmem>>, vector<32x256xf32>
    tpu.vector_store %arg12[%c192, %c0_17], %34 {strides = array<i32>} : memref<288x256xf32, #tpu.memory_space<vmem>>, vector<32x256xf32>,
    %c240_i32 = arith.constant 240 : i32
    %36 = tpu.dynamic_rotate %1 by %c240_i32 dim 1 : vector<32x256xf32>, i32 -> vector<32x256xf32>
    %c7 = arith.constant 7 : index
    %c0_18 = arith.constant 0 : index
    %37 = vector.load %arg2[%c7, %c0_18] : memref<9x256xf32, #tpu.memory_space<vmem>>, vector<1x256xf32>
    %38 = vector.broadcast %37 : vector<1x256xf32> to vector<32x256xf32>
    %39 = arith.mulf %36, %38 : vector<32x256xf32>
    %c224 = arith.constant 224 : index
    %c0_19 = arith.constant 0 : index
    %40 = vector.load %arg12[%c224, %c0_19] : memref<288x256xf32, #tpu.memory_space<vmem>>, vector<32x256xf32>
    tpu.vector_store %arg12[%c224, %c0_19], %39 {strides = array<i32>} : memref<288x256xf32, #tpu.memory_space<vmem>>, vector<32x256xf32>,
    %c239_i32 = arith.constant 239 : i32
    %41 = tpu.dynamic_rotate %1 by %c239_i32 dim 1 : vector<32x256xf32>, i32 -> vector<32x256xf32>
    %c8 = arith.constant 8 : index
    %c0_20 = arith.constant 0 : index
    %42 = vector.load %arg2[%c8, %c0_20] : memref<9x256xf32, #tpu.memory_space<vmem>>, vector<1x256xf32>
    %43 = vector.broadcast %42 : vector<1x256xf32> to vector<32x256xf32>
    %44 = arith.mulf %41, %43 : vector<32x256xf32>
    %c256 = arith.constant 256 : index
    %c0_21 = arith.constant 0 : index
    %45 = vector.load %arg12[%c256, %c0_21] : memref<288x256xf32, #tpu.memory_space<vmem>>, vector<32x256xf32>
    tpu.vector_store %arg12[%c256, %c0_21], %44 {strides = array<i32>} : memref<288x256xf32, #tpu.memory_space<vmem>>, vector<32x256xf32>,
    %c0_22 = arith.constant 0 : index
    %c0_23 = arith.constant 0 : index
    %46 = vector.load %arg3[%c0_22, %c0_23] : memref<32x288xf32, #tpu.memory_space<vmem>>, vector<32x288xf32>
    %c0_24 = arith.constant 0 : index
    %c0_25 = arith.constant 0 : index
    %47 = vector.load %arg12[%c0_24, %c0_25] : memref<288x256xf32, #tpu.memory_space<vmem>>, vector<288x256xf32>
    %cst = arith.constant dense<0.000000e+00> : vector<32x256xf32>
    %48 = tpu.matmul %46, %47, %cst {dimension_numbers = #tpu.dot_dimension_numbers<[1], [0], [0], [1], [0, 0, 1, 1], [], []>} : vector<32x288xf32>, vector<288x256xf32>, vector<32x256xf32> -> vector<32x256xf32>
    %c0_26 = arith.constant 0 : index
    %c0_27 = arith.constant 0 : index
    %49 = vector.load %arg4[%c0_26, %c0_27] : memref<32x1xf32, #tpu.memory_space<vmem>>, vector<32x1xf32>
    %50 = vector.broadcast %49 : vector<32x1xf32> to vector<32x256xf32>
    %51 = arith.addf %48, %50 : vector<32x256xf32>
    %cst_28 = arith.constant 0.000000e+00 : f32
    %52 = vector.broadcast %cst_28 : f32 to vector<32x256xf32>
    %53 = arith.maximumf %51, %52 : vector<32x256xf32>
    %c17_i32_29 = arith.constant 17 : i32
    %54 = tpu.dynamic_rotate %53 by %c17_i32_29 dim 1 : vector<32x256xf32>, i32 -> vector<32x256xf32>
    %c0_30 = arith.constant 0 : index
    %c0_31 = arith.constant 0 : index
    %55 = vector.load %arg2[%c0_30, %c0_31] : memref<9x256xf32, #tpu.memory_space<vmem>>, vector<1x256xf32>
    %56 = vector.broadcast %55 : vector<1x256xf32> to vector<32x256xf32>
    %57 = arith.mulf %54, %56 : vector<32x256xf32>
    %c0_32 = arith.constant 0 : index
    %c0_33 = arith.constant 0 : index
    %58 = vector.load %arg12[%c0_32, %c0_33] : memref<288x256xf32, #tpu.memory_space<vmem>>, vector<32x256xf32>
    tpu.vector_store %arg12[%c0_32, %c0_33], %57 {strides = array<i32>} : memref<288x256xf32, #tpu.memory_space<vmem>>, vector<32x256xf32>,
    %c16_i32_34 = arith.constant 16 : i32
    %59 = tpu.dynamic_rotate %53 by %c16_i32_34 dim 1 : vector<32x256xf32>, i32 -> vector<32x256xf32>
    %c1_35 = arith.constant 1 : index
    %c0_36 = arith.constant 0 : index
    %60 = vector.load %arg2[%c1_35, %c0_36] : memref<9x256xf32, #tpu.memory_space<vmem>>, vector<1x256xf32>
    %61 = vector.broadcast %60 : vector<1x256xf32> to vector<32x256xf32>
    %62 = arith.mulf %59, %61 : vector<32x256xf32>
    %c32_37 = arith.constant 32 : index
    %c0_38 = arith.constant 0 : index
    %63 = vector.load %arg12[%c32_37, %c0_38] : memref<288x256xf32, #tpu.memory_space<vmem>>, vector<32x256xf32>
    tpu.vector_store %arg12[%c32_37, %c0_38], %62 {strides = array<i32>} : memref<288x256xf32, #tpu.memory_space<vmem>>, vector<32x256xf32>,
    %c15_i32_39 = arith.constant 15 : i32
    %64 = tpu.dynamic_rotate %53 by %c15_i32_39 dim 1 : vector<32x256xf32>, i32 -> vector<32x256xf32>
    %c2_40 = arith.constant 2 : index
    %c0_41 = arith.constant 0 : index
    %65 = vector.load %arg2[%c2_40, %c0_41] : memref<9x256xf32, #tpu.memory_space<vmem>>, vector<1x256xf32>
    %66 = vector.broadcast %65 : vector<1x256xf32> to vector<32x256xf32>
    %67 = arith.mulf %64, %66 : vector<32x256xf32>
    %c64_42 = arith.constant 64 : index
    %c0_43 = arith.constant 0 : index
    %68 = vector.load %arg12[%c64_42, %c0_43] : memref<288x256xf32, #tpu.memory_space<vmem>>, vector<32x256xf32>
    tpu.vector_store %arg12[%c64_42, %c0_43], %67 {strides = array<i32>} : memref<288x256xf32, #tpu.memory_space<vmem>>, vector<32x256xf32>,
    %c1_i32_44 = arith.constant 1 : i32
    %69 = tpu.dynamic_rotate %53 by %c1_i32_44 dim 1 : vector<32x256xf32>, i32 -> vector<32x256xf32>
    %c3_45 = arith.constant 3 : index
    %c0_46 = arith.constant 0 : index
    %70 = vector.load %arg2[%c3_45, %c0_46] : memref<9x256xf32, #tpu.memory_space<vmem>>, vector<1x256xf32>
    %71 = vector.broadcast %70 : vector<1x256xf32> to vector<32x256xf32>
    %72 = arith.mulf %69, %71 : vector<32x256xf32>
    %c96_47 = arith.constant 96 : index
    %c0_48 = arith.constant 0 : index
    %73 = vector.load %arg12[%c96_47, %c0_48] : memref<288x256xf32, #tpu.memory_space<vmem>>, vector<32x256xf32>
    tpu.vector_store %arg12[%c96_47, %c0_48], %72 {strides = array<i32>} : memref<288x256xf32, #tpu.memory_space<vmem>>, vector<32x256xf32>,
    %c4_49 = arith.constant 4 : index
    %c0_50 = arith.constant 0 : index
    %74 = vector.load %arg2[%c4_49, %c0_50] : memref<9x256xf32, #tpu.memory_space<vmem>>, vector<1x256xf32>
    %75 = vector.broadcast %74 : vector<1x256xf32> to vector<32x256xf32>
    %76 = arith.mulf %53, %75 : vector<32x256xf32>
    %c128_51 = arith.constant 128 : index
    %c0_52 = arith.constant 0 : index
    %77 = vector.load %arg12[%c128_51, %c0_52] : memref<288x256xf32, #tpu.memory_space<vmem>>, vector<32x256xf32>
    tpu.vector_store %arg12[%c128_51, %c0_52], %76 {strides = array<i32>} : memref<288x256xf32, #tpu.memory_space<vmem>>, vector<32x256xf32>,
    %c255_i32_53 = arith.constant 255 : i32
    %78 = tpu.dynamic_rotate %53 by %c255_i32_53 dim 1 : vector<32x256xf32>, i32 -> vector<32x256xf32>
    %c5_54 = arith.constant 5 : index
    %c0_55 = arith.constant 0 : index
    %79 = vector.load %arg2[%c5_54, %c0_55] : memref<9x256xf32, #tpu.memory_space<vmem>>, vector<1x256xf32>
    %80 = vector.broadcast %79 : vector<1x256xf32> to vector<32x256xf32>
    %81 = arith.mulf %78, %80 : vector<32x256xf32>
    %c160_56 = arith.constant 160 : index
    %c0_57 = arith.constant 0 : index
    %82 = vector.load %arg12[%c160_56, %c0_57] : memref<288x256xf32, #tpu.memory_space<vmem>>, vector<32x256xf32>
    tpu.vector_store %arg12[%c160_56, %c0_57], %81 {strides = array<i32>} : memref<288x256xf32, #tpu.memory_space<vmem>>, vector<32x256xf32>,
    %c241_i32_58 = arith.constant 241 : i32
    %83 = tpu.dynamic_rotate %53 by %c241_i32_58 dim 1 : vector<32x256xf32>, i32 -> vector<32x256xf32>
    %c6_59 = arith.constant 6 : index
    %c0_60 = arith.constant 0 : index
    %84 = vector.load %arg2[%c6_59, %c0_60] : memref<9x256xf32, #tpu.memory_space<vmem>>, vector<1x256xf32>
    %85 = vector.broadcast %84 : vector<1x256xf32> to vector<32x256xf32>
    %86 = arith.mulf %83, %85 : vector<32x256xf32>
    %c192_61 = arith.constant 192 : index
    %c0_62 = arith.constant 0 : index
    %87 = vector.load %arg12[%c192_61, %c0_62] : memref<288x256xf32, #tpu.memory_space<vmem>>, vector<32x256xf32>
    tpu.vector_store %arg12[%c192_61, %c0_62], %86 {strides = array<i32>} : memref<288x256xf32, #tpu.memory_space<vmem>>, vector<32x256xf32>,
    %c240_i32_63 = arith.constant 240 : i32
    %88 = tpu.dynamic_rotate %53 by %c240_i32_63 dim 1 : vector<32x256xf32>, i32 -> vector<32x256xf32>
    %c7_64 = arith.constant 7 : index
    %c0_65 = arith.constant 0 : index
    %89 = vector.load %arg2[%c7_64, %c0_65] : memref<9x256xf32, #tpu.memory_space<vmem>>, vector<1x256xf32>
    %90 = vector.broadcast %89 : vector<1x256xf32> to vector<32x256xf32>
    %91 = arith.mulf %88, %90 : vector<32x256xf32>
    %c224_66 = arith.constant 224 : index
    %c0_67 = arith.constant 0 : index
    %92 = vector.load %arg12[%c224_66, %c0_67] : memref<288x256xf32, #tpu.memory_space<vmem>>, vector<32x256xf32>
    tpu.vector_store %arg12[%c224_66, %c0_67], %91 {strides = array<i32>} : memref<288x256xf32, #tpu.memory_space<vmem>>, vector<32x256xf32>,
    %c239_i32_68 = arith.constant 239 : i32
    %93 = tpu.dynamic_rotate %53 by %c239_i32_68 dim 1 : vector<32x256xf32>, i32 -> vector<32x256xf32>
    %c8_69 = arith.constant 8 : index
    %c0_70 = arith.constant 0 : index
    %94 = vector.load %arg2[%c8_69, %c0_70] : memref<9x256xf32, #tpu.memory_space<vmem>>, vector<1x256xf32>
    %95 = vector.broadcast %94 : vector<1x256xf32> to vector<32x256xf32>
    %96 = arith.mulf %93, %95 : vector<32x256xf32>
    %c256_71 = arith.constant 256 : index
    %c0_72 = arith.constant 0 : index
    %97 = vector.load %arg12[%c256_71, %c0_72] : memref<288x256xf32, #tpu.memory_space<vmem>>, vector<32x256xf32>
    tpu.vector_store %arg12[%c256_71, %c0_72], %96 {strides = array<i32>} : memref<288x256xf32, #tpu.memory_space<vmem>>, vector<32x256xf32>,
    %c0_73 = arith.constant 0 : index
    %c0_74 = arith.constant 0 : index
    %98 = vector.load %arg5[%c0_73, %c0_74] : memref<32x288xf32, #tpu.memory_space<vmem>>, vector<32x288xf32>
    %c0_75 = arith.constant 0 : index
    %c0_76 = arith.constant 0 : index
    %99 = vector.load %arg12[%c0_75, %c0_76] : memref<288x256xf32, #tpu.memory_space<vmem>>, vector<288x256xf32>
    %cst_77 = arith.constant dense<0.000000e+00> : vector<32x256xf32>
    %100 = tpu.matmul %98, %99, %cst_77 {dimension_numbers = #tpu.dot_dimension_numbers<[1], [0], [0], [1], [0, 0, 1, 1], [], []>} : vector<32x288xf32>, vector<288x256xf32>, vector<32x256xf32> -> vector<32x256xf32>
    %c0_78 = arith.constant 0 : index
    %c0_79 = arith.constant 0 : index
    %101 = vector.load %arg6[%c0_78, %c0_79] : memref<32x1xf32, #tpu.memory_space<vmem>>, vector<32x1xf32>
    %102 = vector.broadcast %101 : vector<32x1xf32> to vector<32x256xf32>
    %103 = arith.addf %100, %102 : vector<32x256xf32>
    %cst_80 = arith.constant dense<0.000000e+00> : vector<32xf32>
    %104 = vector.multi_reduction <add>, %103, %cst_80 [1] : vector<32x256xf32> to vector<32xf32>
    %105 = vector.shape_cast %104 : vector<32xf32> to vector<32x1xf32>
    %cst_81 = arith.constant 2.560000e+02 : f32
    %106 = vector.broadcast %cst_81 : f32 to vector<32x1xf32>
    %107 = arith.divf %105, %106 : vector<32x1xf32>
    %c0_82 = arith.constant 0 : index
    %c0_83 = arith.constant 0 : index
    %108 = vector.load %arg7[%c0_82, %c0_83] : memref<32x2xf32, #tpu.memory_space<vmem>>, vector<32x2xf32>
    %109 = vector.broadcast %107 : vector<32x1xf32> to vector<32x2xf32>
    %110 = arith.mulf %108, %109 : vector<32x2xf32>
    %cst_84 = arith.constant dense<0.000000e+00> : vector<2xf32>
    %111 = vector.multi_reduction <add>, %110, %cst_84 [0] : vector<32x2xf32> to vector<2xf32>
    %112 = vector.shape_cast %111 : vector<2xf32> to vector<1x2xf32>
    %c0_85 = arith.constant 0 : index
    %c0_86 = arith.constant 0 : index
    %113 = vector.load %arg8[%c0_85, %c0_86] : memref<1x2xf32, #tpu.memory_space<vmem>>, vector<1x2xf32>
    %114 = arith.addf %112, %113 : vector<1x2xf32>
    %cst_87 = arith.constant 0.000000e+00 : f32
    %115 = vector.broadcast %cst_87 : f32 to vector<1x2xf32>
    %116 = arith.maximumf %114, %115 : vector<1x2xf32>
    %c0_88 = arith.constant 0 : index
    %c0_89 = arith.constant 0 : index
    %117 = vector.load %arg9[%c0_88, %c0_89] : memref<32x2xf32, #tpu.memory_space<vmem>>, vector<32x2xf32>
    %118 = vector.broadcast %116 : vector<1x2xf32> to vector<32x2xf32>
    %119 = arith.mulf %117, %118 : vector<32x2xf32>
    %cst_90 = arith.constant dense<0.000000e+00> : vector<32xf32>
    %120 = vector.multi_reduction <add>, %119, %cst_90 [1] : vector<32x2xf32> to vector<32xf32>
    %121 = vector.shape_cast %120 : vector<32xf32> to vector<32x1xf32>
    %c0_91 = arith.constant 0 : index
    %c0_92 = arith.constant 0 : index
    %122 = vector.load %arg10[%c0_91, %c0_92] : memref<32x1xf32, #tpu.memory_space<vmem>>, vector<32x1xf32>
    %123 = arith.addf %121, %122 : vector<32x1xf32>
    %124 = arith.negf %123 : vector<32x1xf32>
    %125 = math.exp %124 : vector<32x1xf32>
    %cst_93 = arith.constant 1.000000e+00 : f32
    %126 = vector.broadcast %cst_93 : f32 to vector<32x1xf32>
    %127 = arith.addf %126, %125 : vector<32x1xf32>
    %128 = arith.divf %126, %127 : vector<32x1xf32>
    %cst_94 = arith.constant 1.000000e+00 : f32
    %129 = vector.broadcast %cst_94 : f32 to vector<32x1xf32>
    %130 = arith.mulf %128, %129 : vector<32x1xf32>
    %131 = vector.broadcast %130 : vector<32x1xf32> to vector<32x256xf32>
    %132 = arith.mulf %103, %131 : vector<32x256xf32>
    %133 = arith.addf %132, %1 : vector<32x256xf32>
    %c0_95 = arith.constant 0 : index
    %c0_96 = arith.constant 0 : index
    %c0_97 = arith.constant 0 : index
    %134 = vector.load %arg11[%c0_95, %c0_96, %c0_97] : memref<1x32x256xf32, #tpu.memory_space<vmem>>, vector<1x32x256xf32>
    %135 = vector.shape_cast %134 : vector<1x32x256xf32> to vector<32x256xf32>
    %136 = vector.shape_cast %133 : vector<32x256xf32> to vector<1x32x256xf32>
    tpu.vector_store %arg11[%c0_95, %c0_96, %c0_97], %136 {strides = array<i32>} : memref<1x32x256xf32, #tpu.memory_space<vmem>>, vector<1x32x256xf32>,
    return
  }
  func.func @transform_0(%arg0: i32) -> (i32, i32, i32) {
    %c0_i32 = arith.constant 0 : i32
    %c0_i32_0 = arith.constant 0 : i32
    %c0_i32_1 = arith.constant 0 : i32
    return %arg0, %c0_i32, %c0_i32_0 : i32, i32, i32
  }
  func.func @transform_1(%arg0: i32) -> (i32, i32) {
    %c0_i32 = arith.constant 0 : i32
    %c0_i32_0 = arith.constant 0 : i32
    %c0_i32_1 = arith.constant 0 : i32
    return %c0_i32, %c0_i32_0 : i32, i32
  }
  func.func @transform_2(%arg0: i32) -> (i32, i32) {
    %c0_i32 = arith.constant 0 : i32
    %c0_i32_0 = arith.constant 0 : i32
    %c0_i32_1 = arith.constant 0 : i32
    return %c0_i32, %c0_i32_0 : i32, i32
  }
  func.func @transform_3(%arg0: i32) -> (i32, i32) {
    %c0_i32 = arith.constant 0 : i32
    %c0_i32_0 = arith.constant 0 : i32
    %c0_i32_1 = arith.constant 0 : i32
    return %c0_i32, %c0_i32_0 : i32, i32
  }
  func.func @transform_4(%arg0: i32) -> (i32, i32) {
    %c0_i32 = arith.constant 0 : i32
    %c0_i32_0 = arith.constant 0 : i32
    %c0_i32_1 = arith.constant 0 : i32
    return %c0_i32, %c0_i32_0 : i32, i32
  }
  func.func @transform_5(%arg0: i32) -> (i32, i32) {
    %c0_i32 = arith.constant 0 : i32
    %c0_i32_0 = arith.constant 0 : i32
    %c0_i32_1 = arith.constant 0 : i32
    return %c0_i32, %c0_i32_0 : i32, i32
  }
  func.func @transform_6(%arg0: i32) -> (i32, i32) {
    %c0_i32 = arith.constant 0 : i32
    %c0_i32_0 = arith.constant 0 : i32
    %c0_i32_1 = arith.constant 0 : i32
    return %c0_i32, %c0_i32_0 : i32, i32
  }
  func.func @transform_7(%arg0: i32) -> (i32, i32) {
    %c0_i32 = arith.constant 0 : i32
    %c0_i32_0 = arith.constant 0 : i32
    %c0_i32_1 = arith.constant 0 : i32
    return %c0_i32, %c0_i32_0 : i32, i32
  }
  func.func @transform_8(%arg0: i32) -> (i32, i32) {
    %c0_i32 = arith.constant 0 : i32
    %c0_i32_0 = arith.constant 0 : i32
    %c0_i32_1 = arith.constant 0 : i32
    return %c0_i32, %c0_i32_0 : i32, i32
  }
  func.func @transform_9(%arg0: i32) -> (i32, i32) {
    %c0_i32 = arith.constant 0 : i32
    %c0_i32_0 = arith.constant 0 : i32
    %c0_i32_1 = arith.constant 0 : i32
    return %c0_i32, %c0_i32_0 : i32, i32
  }
  func.func @transform_10(%arg0: i32) -> (i32, i32, i32) {
    %c0_i32 = arith.constant 0 : i32
    %c0_i32_0 = arith.constant 0 : i32
    %c0_i32_1 = arith.constant 0 : i32
    return %arg0, %c0_i32, %c0_i32_0 : i32, i32, i32
  }
}

</mosaic_0001>

<llo_original>
// kernel: tpu_custom_call.1
$region0: #{tpu_custom_call.1}
  #allocation0 [shape = 'u32[]', space=smem, size = 0x4, offset = 0x4, fixed_abs, tag = 'smem constant byte address 0x4 - core index']
  #allocation1 [shape = 'u32[144,128]{1,0:T(1,128)}', space=vmem, size = 0x12000, scoped, tag = 'internal scratch']
  #allocation2 [shape = 'f32[288,256]{1,0:T(8,128)}', space=vmem, size = 0x48000, scoped, tag = 'scratch operand']
  %s0 = inlined_call_operand.vmem [shape: f32[2,32,256], index: 0, kind: input, shape index: {}]
  %s1 = inlined_call_operand.vmem [shape: f32[9,256], index: 1, kind: input, shape index: {}]
  %s2 = inlined_call_operand.hbm [shape: f32[32,288], index: 2, kind: input, shape index: {}]
  %s3 = inlined_call_operand.vmem [shape: f32[32,1], index: 3, kind: input, shape index: {}]
  %s4 = inlined_call_operand.hbm [shape: f32[32,288], index: 4, kind: input, shape index: {}]
  %s5 = inlined_call_operand.vmem [shape: f32[32,1], index: 5, kind: input, shape index: {}]
  %s6 = inlined_call_operand.vmem [shape: f32[32,2], index: 6, kind: input, shape index: {}]
  %s7 = inlined_call_operand.vmem [shape: f32[1,2], index: 7, kind: input, shape index: {}]
  %s8 = inlined_call_operand.vmem [shape: f32[32,2], index: 8, kind: input, shape index: {}]
  %s9 = inlined_call_operand.vmem [shape: f32[32,1], index: 9, kind: input, shape index: {}]
  %s10 = inlined_call_operand.hbm [shape: f32[2,32,256], index: 10, kind: output, shape index: {}]
  %s11 = sld [smem:[#allocation0]]
  $region81: #{tpu_custom_call.1} parent=0
    _
  %s13 = ssub.s32 1, %s11
  %s14 = scalar_select 0, %s13, %s11
  $region1: #{tpu_custom_call.1} parent=0
    #allocation3 [shape = 'u8[49152]{0}', space=vmem, size = 0xc000, scoped, tag = 'input window, operand 2, single buffered']
    #allocation4 [shape = 's32[2]{0}', space=sflag, size = 0x8, scoped, tag = 'scoped memory for tpu_custom_call.1']
    #allocation5 [shape = 's32[2]{0}', space=sflag, size = 0x8, scoped, tag = 'scoped memory for tpu_custom_call.1']
    #allocation6 [shape = 'u8[49152]{0}', space=vmem, size = 0xc000, scoped, tag = 'input window, operand 4, single buffered']
    #allocation7 [shape = 's32[1]{0}', space=sflag, size = 0x4, scoped, tag = 'scoped memory for tpu_custom_call.1']
    #allocation8 [shape = 'u8[65536]{0}', space=vmem, size = 0x10000, scoped, tag = 'output window, operand 0']
    %15 = vsyncpa [#allocation4], 0
    %16 = vsyncpa [#allocation7], 0
    %17 = vsyncpa [#allocation5], 0
    %s18 = scalar_lea.sflag [#allocation5], 1
    %19 = vsyncpa %s18, 0
    loop: start=0, step=1, limit=4
    $region2: #{tpu_custom_call.1} parent=1 // loop_pre_header
      _
    $region3: #{tpu_custom_call.1} parent=1 // loop_header
      %s21 = sphi 0, %s25
      %p22 = scmp.ge.s32.totalorder %s21, 4
      %s31 = sphi 0, %s33
      %s34 = sphi 0, %s31
      %s35 = sphi 0, %s34
      %s51 = sphi 0, %s35
      %s55 = sphi 0, %s55
      %s57 = sphi 0, %s55
      %s58 = sphi 0, %s57
      %s72 = sphi 0, %s58
      %s76 = sphi 0, %s76
      %s78 = sphi 0, %s76
      %s79 = sphi 0, %s78
      %s93 = sphi 0, %s79
      %s97 = sphi 0, %s97
      %s99 = sphi 0, %s97
      %s100 = sphi 0, %s99
      %s114 = sphi 0, %s100
      %s118 = sphi 0, %s118
      %s120 = sphi 0, %s118
      %s121 = sphi 0, %s120
      %s135 = sphi 0, %s121
      %s139 = sphi 0, %s139
      %s141 = sphi 0, %s139
      %s142 = sphi 0, %s141
      %s156 = sphi 0, %s142
      %s160 = sphi 0, %s160
      %s162 = sphi 0, %s160
      %s163 = sphi 0, %s162
      %s177 = sphi 0, %s163
      %s181 = sphi 0, %s181
      %s183 = sphi 0, %s181
      %s184 = sphi 0, %s183
      %s198 = sphi 0, %s184
      %s202 = sphi 0, %s202
      %s204 = sphi 0, %s202
      %s205 = sphi 0, %s204
      %s219 = sphi 0, %s205
      %s223 = sphi 0, %s223
      %s225 = sphi 0, %s223
      %s226 = sphi 0, %s225
      %s240 = sphi 0, %s226
      %s246 = sphi 0, %s248
      %s249 = sphi 0, %s246
      %s250 = sphi 0, %s249
      %s266 = sphi 0, %s250
    $region4: #{tpu_custom_call.1} parent=1 // loop_header_branch
      %24 = sbr.rel (%p22) target = $region8
    $region5: #{tpu_custom_call.1} parent=1 // loop_body
      %s26 = ssub.s32 %s21, 1
      %s27 = ssub.s32 %s21, 2
      %s28 = sadd.s32 %s21, 1
      %s29 = ssub.s32 %s21, %s28
      %p30 = scmp.eq.s32.totalorder %s29, 0
      %s32 = sadd.s32 %s31, 1
      %s33 = scalar_select %p30, %s31, %s32
      %p36 = pneg %p30
      %p37 = scmp.eq.s32.totalorder %s21, 1
      %p38 = por %p36, %p37
      %p39 = scmp.ne.s32.totalorder %s31, %s34
      %p40 = scmp.eq.s32.totalorder %s21, 0
      %p41 = por %p39, %p40
      %p42 = scmp.ne.s32.totalorder %s31, %s34
      %p43 = scmp.eq.s32.totalorder %s26, 1
      %p44 = por %p42, %p43
      %p45 = scmp.ne.s32.totalorder %s34, %s35
      %p46 = scmp.eq.s32.totalorder %s26, 0
      %p47 = por %p45, %p46
      %p48 = scmp.ne.s32.totalorder %s34, %s35
      %p49 = scmp.eq.s32.totalorder %s27, 1
      %p50 = por %p48, %p49
      %p52 = scmp.ne.s32.totalorder %s35, %s51
      %p53 = scmp.eq.s32.totalorder %s27, 0
      %p54 = por %p52, %p53
      %s56 = sadd.s32 %s55, 1
      %p59 = scmp.eq.s32.totalorder %s21, 1
      %p60 = scmp.ne.s32.totalorder %s55, %s57
      %p61 = scmp.eq.s32.totalorder %s21, 0
      %p62 = por %p60, %p61
      %p63 = scmp.ne.s32.totalorder %s55, %s57
      %p64 = scmp.eq.s32.totalorder %s26, 1
      %p65 = por %p63, %p64
      %p66 = scmp.ne.s32.totalorder %s57, %s58
      %p67 = scmp.eq.s32.totalorder %s26, 0
      %p68 = por %p66, %p67
      %p69 = scmp.ne.s32.totalorder %s57, %s58
      %p70 = scmp.eq.s32.totalorder %s27, 1
      %p71 = por %p69, %p70
      %p73 = scmp.ne.s32.totalorder %s58, %s72
      %p74 = scmp.eq.s32.totalorder %s27, 0
      %p75 = por %p73, %p74
      %s77 = sadd.s32 %s76, 1
      %p80 = scmp.eq.s32.totalorder %s21, 1
      %p81 = scmp.ne.s32.totalorder %s76, %s78
      %p82 = scmp.eq.s32.totalorder %s21, 0
      %p83 = por %p81, %p82
      %p84 = scmp.ne.s32.totalorder %s76, %s78
      %p85 = scmp.eq.s32.totalorder %s26, 1
      %p86 = por %p84, %p85
      %p87 = scmp.ne.s32.totalorder %s78, %s79
      %p88 = scmp.eq.s32.totalorder %s26, 0
      %p89 = por %p87, %p88
      %p90 = scmp.ne.s32.totalorder %s78, %s79
      %p91 = scmp.eq.s32.totalorder %s27, 1
      %p92 = por %p90, %p91
      %p94 = scmp.ne.s32.totalorder %s79, %s93
      %p95 = scmp.eq.s32.totalorder %s27, 0
      %p96 = por %p94, %p95
      %s98 = sadd.s32 %s97, 1
      %p101 = scmp.eq.s32.totalorder %s21, 1
      %p102 = scmp.ne.s32.totalorder %s97, %s99
      %p103 = scmp.eq.s32.totalorder %s21, 0
      %p104 = por %p102, %p103
      %p105 = scmp.ne.s32.totalorder %s97, %s99
      %p106 = scmp.eq.s32.totalorder %s26, 1
      %p107 = por %p105, %p106
      %p108 = scmp.ne.s32.totalorder %s99, %s100
      %p109 = scmp.eq.s32.totalorder %s26, 0
      %p110 = por %p108, %p109
      %p111 = scmp.ne.s32.totalorder %s99, %s100
      %p112 = scmp.eq.s32.totalorder %s27, 1
      %p113 = por %p111, %p112
      %p115 = scmp.ne.s32.totalorder %s100, %s114
      %p116 = scmp.eq.s32.totalorder %s27, 0
      %p117 = por %p115, %p116
      %s119 = sadd.s32 %s118, 1
      %p122 = scmp.eq.s32.totalorder %s21, 1
      %p123 = scmp.ne.s32.totalorder %s118, %s120
      %p124 = scmp.eq.s32.totalorder %s21, 0
      %p125 = por %p123, %p124
      %p126 = scmp.ne.s32.totalorder %s118, %s120
      %p127 = scmp.eq.s32.totalorder %s26, 1
      %p128 = por %p126, %p127
      %p129 = scmp.ne.s32.totalorder %s120, %s121
      %p130 = scmp.eq.s32.totalorder %s26, 0
      %p131 = por %p129, %p130
      %p132 = scmp.ne.s32.totalorder %s120, %s121
      %p133 = scmp.eq.s32.totalorder %s27, 1
      %p134 = por %p132, %p133
      %p136 = scmp.ne.s32.totalorder %s121, %s135
      %p137 = scmp.eq.s32.totalorder %s27, 0
      %p138 = por %p136, %p137
      %s140 = sadd.s32 %s139, 1
      %p143 = scmp.eq.s32.totalorder %s21, 1
      %p144 = scmp.ne.s32.totalorder %s139, %s141
      %p145 = scmp.eq.s32.totalorder %s21, 0
      %p146 = por %p144, %p145
      %p147 = scmp.ne.s32.totalorder %s139, %s141
      %p148 = scmp.eq.s32.totalorder %s26, 1
      %p149 = por %p147, %p148
      %p150 = scmp.ne.s32.totalorder %s141, %s142
      %p151 = scmp.eq.s32.totalorder %s26, 0
      %p152 = por %p150, %p151
      %p153 = scmp.ne.s32.totalorder %s141, %s142
      %p154 = scmp.eq.s32.totalorder %s27, 1
      %p155 = por %p153, %p154
      %p157 = scmp.ne.s32.totalorder %s142, %s156
      %p158 = scmp.eq.s32.totalorder %s27, 0
      %p159 = por %p157, %p158
      %s161 = sadd.s32 %s160, 1
      %p164 = scmp.eq.s32.totalorder %s21, 1
      %p165 = scmp.ne.s32.totalorder %s160, %s162
      %p166 = scmp.eq.s32.totalorder %s21, 0
      %p167 = por %p165, %p166
      %p168 = scmp.ne.s32.totalorder %s160, %s162
      %p169 = scmp.eq.s32.totalorder %s26, 1
      %p170 = por %p168, %p169
      %p171 = scmp.ne.s32.totalorder %s162, %s163
      %p172 = scmp.eq.s32.totalorder %s26, 0
      %p173 = por %p171, %p172
      %p174 = scmp.ne.s32.totalorder %s162, %s163
      %p175 = scmp.eq.s32.totalorder %s27, 1
      %p176 = por %p174, %p175
      %p178 = scmp.ne.s32.totalorder %s163, %s177
      %p179 = scmp.eq.s32.totalorder %s27, 0
      %p180 = por %p178, %p179
      %s182 = sadd.s32 %s181, 1
      %p185 = scmp.eq.s32.totalorder %s21, 1
      %p186 = scmp.ne.s32.totalorder %s181, %s183
      %p187 = scmp.eq.s32.totalorder %s21, 0
      %p188 = por %p186, %p187
      %p189 = scmp.ne.s32.totalorder %s181, %s183
      %p190 = scmp.eq.s32.totalorder %s26, 1
      %p191 = por %p189, %p190
      %p192 = scmp.ne.s32.totalorder %s183, %s184
      %p193 = scmp.eq.s32.totalorder %s26, 0
      %p194 = por %p192, %p193
      %p195 = scmp.ne.s32.totalorder %s183, %s184
      %p196 = scmp.eq.s32.totalorder %s27, 1
      %p197 = por %p195, %p196
      %p199 = scmp.ne.s32.totalorder %s184, %s198
      %p200 = scmp.eq.s32.totalorder %s27, 0
      %p201 = por %p199, %p200
      %s203 = sadd.s32 %s202, 1
      %p206 = scmp.eq.s32.totalorder %s21, 1
      %p207 = scmp.ne.s32.totalorder %s202, %s204
      %p208 = scmp.eq.s32.totalorder %s21, 0
      %p209 = por %p207, %p208
      %p210 = scmp.ne.s32.totalorder %s202, %s204
      %p211 = scmp.eq.s32.totalorder %s26, 1
      %p212 = por %p210, %p211
      %p213 = scmp.ne.s32.totalorder %s204, %s205
      %p214 = scmp.eq.s32.totalorder %s26, 0
      %p215 = por %p213, %p214
      %p216 = scmp.ne.s32.totalorder %s204, %s205
      %p217 = scmp.eq.s32.totalorder %s27, 1
      %p218 = por %p216, %p217
      %p220 = scmp.ne.s32.totalorder %s205, %s219
      %p221 = scmp.eq.s32.totalorder %s27, 0
      %p222 = por %p220, %p221
      %s224 = sadd.s32 %s223, 1
      %p227 = scmp.eq.s32.totalorder %s21, 1
      %p228 = scmp.ne.s32.totalorder %s223, %s225
      %p229 = scmp.eq.s32.totalorder %s21, 0
      %p230 = por %p228, %p229
      %p231 = scmp.ne.s32.totalorder %s223, %s225
      %p232 = scmp.eq.s32.totalorder %s26, 1
      %p233 = por %p231, %p232
      %p234 = scmp.ne.s32.totalorder %s225, %s226
      %p235 = scmp.eq.s32.totalorder %s26, 0
      %p236 = por %p234, %p235
      %p237 = scmp.ne.s32.totalorder %s225, %s226
      %p238 = scmp.eq.s32.totalorder %s27, 1
      %p239 = por %p237, %p238
      %p241 = scmp.ne.s32.totalorder %s226, %s240
      %p242 = scmp.eq.s32.totalorder %s27, 0
      %p243 = por %p241, %p242
      %s244 = ssub.s32 %s21, %s28
      %p245 = scmp.eq.s32.totalorder %s244, 0
      %s247 = sadd.s32 %s246, 1
      %s248 = scalar_select %p245, %s246, %s247
      %p251 = pneg %p245
      %p252 = scmp.eq.s32.totalorder %s21, 1
      %p253 = por %p251, %p252
      %p254 = scmp.ne.s32.totalorder %s246, %s249
      %p255 = scmp.eq.s32.totalorder %s21, 0
      %p256 = por %p254, %p255
      %p257 = scmp.ne.s32.totalorder %s246, %s249
      %p258 = scmp.eq.s32.totalorder %s26, 1
      %p259 = por %p257, %p258
      %p260 = scmp.ne.s32.totalorder %s249, %s250
      %p261 = scmp.eq.s32.totalorder %s26, 0
      %p262 = por %p260, %p261
      %p263 = scmp.ne.s32.totalorder %s249, %s250
      %p264 = scmp.eq.s32.totalorder %s27, 1
      %p265 = por %p263, %p264
      %p267 = scmp.ne.s32.totalorder %s250, %s266
      %p268 = scmp.eq.s32.totalorder %s27, 0
      %p269 = por %p267, %p268
      %p270 = scmp.le.s32.totalorder 1, %s21
      %p271 = scmp.lt.s32.totalorder %s21, 3
      %p272 = pnand %p270, %p271
      %p273 = pneg %p272
      // Predicated region
      $region9: #{tpu_custom_call.1} parent=5 // pred_check
        _
      $region10: #{tpu_custom_call.1} parent=5 // pred_check_branch
        %275 = sbr.rel (%p272) target = $region12
      $region11: #{tpu_custom_call.1} parent=5 // pred_region
        %s276 = ssub.s32 %s21, 1
        // Predicated region
        $region13: #{tpu_custom_call.1} parent=11 // pred_check
          %p277 = pneg %p68
        $region14: #{tpu_custom_call.1} parent=11 // pred_check_branch
          %279 = sbr.rel (%p277) target = $region16
        $region15: #{tpu_custom_call.1} parent=11 // pred_region
          _
        $region16: #{tpu_custom_call.1} parent=11 // pred_fallthru
          _
        // Predicated region
        $region17: #{tpu_custom_call.1} parent=11 // pred_check
          %p280 = pneg %p89
        $region18: #{tpu_custom_call.1} parent=11 // pred_check_branch
          %282 = sbr.rel (%p280) target = $region20
        $region19: #{tpu_custom_call.1} parent=11 // pred_region
          %s284 = ssub.s32 1536, 1536
          %285 = vsyncadd [#allocation4], %s284
          %s286 = sshll.u32 [#allocation3], 4
          %s287 = int_to_ptr.vmem [resolvable:$true] %s286
          %292 = dma.hbm_to_vmem [thread:$0]  %s2, 1536, %s287, [#allocation4], 384, 384, 24
        $region20: #{tpu_custom_call.1} parent=11 // pred_fallthru
          _
        // Predicated region
        $region21: #{tpu_custom_call.1} parent=11 // pred_check
          %p293 = pneg %p110
        $region22: #{tpu_custom_call.1} parent=11 // pred_check_branch
          %295 = sbr.rel (%p293) target = $region24
        $region23: #{tpu_custom_call.1} parent=11 // pred_region
          _
        $region24: #{tpu_custom_call.1} parent=11 // pred_fallthru
          _
        // Predicated region
        $region25: #{tpu_custom_call.1} parent=11 // pred_check
          %p296 = pneg %p131
        $region26: #{tpu_custom_call.1} parent=11 // pred_check_branch
          %298 = sbr.rel (%p296) target = $region28
        $region27: #{tpu_custom_call.1} parent=11 // pred_region
          %s300 = ssub.s32 1536, 1536
          %301 = vsyncadd [#allocation7], %s300
          %s302 = sshll.u32 [#allocation6], 4
          %s303 = int_to_ptr.vmem [resolvable:$true] %s302
          %308 = dma.hbm_to_vmem [thread:$0]  %s4, 1536, %s303, [#allocation7], 384, 384, 24
        $region28: #{tpu_custom_call.1} parent=11 // pred_fallthru
          _
        // Predicated region
        $region29: #{tpu_custom_call.1} parent=11 // pred_check
          %p309 = pneg %p152
        $region30: #{tpu_custom_call.1} parent=11 // pred_check_branch
          %311 = sbr.rel (%p309) target = $region32
        $region31: #{tpu_custom_call.1} parent=11 // pred_region
          _
        $region32: #{tpu_custom_call.1} parent=11 // pred_fallthru
          _
        // Predicated region
        $region33: #{tpu_custom_call.1} parent=11 // pred_check
          %p312 = pneg %p173
        $region34: #{tpu_custom_call.1} parent=11 // pred_check_branch
          %314 = sbr.rel (%p312) target = $region36
        $region35: #{tpu_custom_call.1} parent=11 // pred_region
          _
        $region36: #{tpu_custom_call.1} parent=11 // pred_fallthru
          _
        // Predicated region
        $region37: #{tpu_custom_call.1} parent=11 // pred_check
          %p315 = pneg %p194
        $region38: #{tpu_custom_call.1} parent=11 // pred_check_branch
          %317 = sbr.rel (%p315) target = $region40
        $region39: #{tpu_custom_call.1} parent=11 // pred_region
          _
        $region40: #{tpu_custom_call.1} parent=11 // pred_fallthru
          _
        // Predicated region
        $region41: #{tpu_custom_call.1} parent=11 // pred_check
          %p318 = pneg %p215
        $region42: #{tpu_custom_call.1} parent=11 // pred_check_branch
          %320 = sbr.rel (%p318) target = $region44
        $region43: #{tpu_custom_call.1} parent=11 // pred_region
          _
        $region44: #{tpu_custom_call.1} parent=11 // pred_fallthru
          _
        // Predicated region
        $region45: #{tpu_custom_call.1} parent=11 // pred_check
          %p321 = pneg %p236
        $region46: #{tpu_custom_call.1} parent=11 // pred_check_branch
          %323 = sbr.rel (%p321) target = $region48
        $region47: #{tpu_custom_call.1} parent=11 // pred_region
          _
        $region48: #{tpu_custom_call.1} parent=11 // pred_fallthru
          _
      $region12: #{tpu_custom_call.1} parent=5 // pred_fallthru
        _
      %p324 = scmp.lt.s32.totalorder %s21, 2
      // Predicated region
      $region49: #{tpu_custom_call.1} parent=5 // pred_check
        %p325 = pneg %p324
      $region50: #{tpu_custom_call.1} parent=5 // pred_check_branch
        %327 = sbr.rel (%p325) target = $region52
      $region51: #{tpu_custom_call.1} parent=5 // pred_region
        // Predicated region
        $region53: #{tpu_custom_call.1} parent=51 // pred_check
          %p328 = pneg %p41
        $region54: #{tpu_custom_call.1} parent=51 // pred_check_branch
          %330 = sbr.rel (%p328) target = $region56
        $region55: #{tpu_custom_call.1} parent=51 // pred_region
          %p331 = scmp.lt.s32.totalorder %s21, 1
          %s332 = scalar_select %p331, %s21, 1
          %s333 = smul.addr %s332, 8
          %s334 = smul.addr %s333, 8
          %s335 = scalar_lea.vmem %s0, %s334
        $region56: #{tpu_custom_call.1} parent=51 // pred_fallthru
          _
      $region52: #{tpu_custom_call.1} parent=5 // pred_fallthru
        _
      %p336 = scmp.le.s32.totalorder 1, %s21
      %p337 = scmp.lt.s32.totalorder %s21, 3
      %p338 = pnand %p336, %p337
      %p339 = pneg %p338
      // Predicated region
      $region57: #{tpu_custom_call.1} parent=5 // pred_check
        _
      $region58: #{tpu_custom_call.1} parent=5 // pred_check_branch
        %341 = sbr.rel (%p338) target = $region60
      $region59: #{tpu_custom_call.1} parent=5 // pred_region
        %s342 = ssub.s32 %s21, 1
        // Predicated region
        $region61: #{tpu_custom_call.1} parent=59 // pred_check
          %p343 = pneg %p89
        $region62: #{tpu_custom_call.1} parent=59 // pred_check_branch
          %345 = sbr.rel (%p343) target = $region64
        $region63: #{tpu_custom_call.1} parent=59 // pred_region
          %346 = dma.done [#allocation4], 1536
        $region64: #{tpu_custom_call.1} parent=59 // pred_fallthru
          _
        // Predicated region
        $region65: #{tpu_custom_call.1} parent=59 // pred_check
          %p347 = pneg %p131
        $region66: #{tpu_custom_call.1} parent=59 // pred_check_branch
          %349 = sbr.rel (%p347) target = $region68
        $region67: #{tpu_custom_call.1} parent=59 // pred_region
          %350 = dma.done [#allocation7], 1536
        $region68: #{tpu_custom_call.1} parent=59 // pred_fallthru
          _
        %p351 = scmp.lt.s32.totalorder %s26, 1
        %s352 = scalar_select %p351, %s26, 1
        %s353 = smul.addr %s352, 8
        %s354 = smul.addr %s353, 8
        %s355 = scalar_lea.vmem %s0, %s354
        %p356 = pneg %p47
        %p357 = pneg %p44
        %p358 = pneg %p68
        %p359 = pneg %p65
        %p360 = pneg %p89
        %p361 = pneg %p86
        %p362 = pneg %p110
        %p363 = pneg %p107
        %p364 = pneg %p131
        %p365 = pneg %p128
        %p366 = pneg %p152
        %p367 = pneg %p149
        %p368 = pneg %p173
        %p369 = pneg %p170
        %p370 = pneg %p194
        %p371 = pneg %p191
        %p372 = pneg %p215
        %p373 = pneg %p212
        %p374 = pneg %p236
        %p375 = pneg %p233
        %p376 = pneg %p262
        %p377 = pneg %p259
        %s378 = sand.u32 %s249, 1
        %s379 = scalar_lea.sflag [#allocation5], %s378
        %s380 = sand.u32 %s249, 1
        %s381 = smul.addr %s380, 64
        %s382 = scalar_lea.vmem [#allocation8], %s381
        %p383 = scmp.lt.s32.totalorder %s26, 1
        %s384 = scalar_select %p383, %s26, 1
        %s385 = smul.addr %s384, 8
        %s386 = smul.addr %s385, 8
        %s387 = scalar_lea.vmem %s0, %s386
        %v388 = vld [vmem:[%s387] sm:$0xff]
        %v389 = vld [vmem:[%s387 + $0x8] sm:$0xff]
        %v390 = vld [vmem:[%s387 + $0x10] sm:$0xff]
        %v391 = vld [vmem:[%s387 + $0x18] sm:$0xff]
        %v392 = vld [vmem:[%s387 + $0x20] sm:$0xff]
        %v393 = vld [vmem:[%s387 + $0x28] sm:$0xff]
        %v394 = vld [vmem:[%s387 + $0x30] sm:$0xff]
        %v395 = vld [vmem:[%s387 + $0x38] sm:$0xff]
        %396 = vrot.lane.b32.xlu0 %v388, 17
        %v397 = vpop.permute.xlu0 %396
        %398 = vrot.lane.b32.xlu0 %v390, 17
        %v399 = vpop.permute.xlu0 %398
        %400 = vrot.lane.b32.xlu0 %v392, 17
        %v401 = vpop.permute.xlu0 %400
        %402 = vrot.lane.b32.xlu0 %v394, 17
        %v403 = vpop.permute.xlu0 %402
        %404 = vrot.lane.b32.xlu0 %v389, 17
        %v405 = vpop.permute.xlu0 %404
        %406 = vrot.lane.b32.xlu0 %v391, 17
        %v407 = vpop.permute.xlu0 %406
        %408 = vrot.lane.b32.xlu0 %v393, 17
        %v409 = vpop.permute.xlu0 %408
        %410 = vrot.lane.b32.xlu0 %v395, 17
        %v411 = vpop.permute.xlu0 %410
        %v412 = vlaneseq
        %v413 = vand.u32 %v412, 127
        %vm414 = vcmp.lt.s32.totalorder %v413, 17
        %v415 = vsel %vm414, %v397, %v405
        %v416 = vsel %vm414, %v399, %v407
        %v417 = vsel %vm414, %v401, %v409
        %v418 = vsel %vm414, %v403, %v411
        %v419 = vsel %vm414, %v405, %v397
        %v420 = vsel %vm414, %v407, %v399
        %v421 = vsel %vm414, %v409, %v401
        %v422 = vsel %vm414, %v411, %v403
        %v423 = vld [vmem:[%s1] ss:$8 sm:$0x3]
        %v425 = vlaneseq
        %v426 = vshrl.u32 %v425, 7
        %v427 = vsub.s32 0, %v426
        %v428 = vrot.slane %v423, %v427
        %v429 = vlaneseq
        %v430 = vshrl.u32 %v429, 7
        %v431 = vsub.s32 1, %v430
        %v432 = vrot.slane %v423, %v431
        %v435 = vmul.f32 %v419, %v428
        %v436 = vmul.f32 %v415, %v432
        %v437 = vmul.f32 %v420, %v428
        %v438 = vmul.f32 %v416, %v432
        %v439 = vmul.f32 %v421, %v428
        %v440 = vmul.f32 %v417, %v432
        %v441 = vmul.f32 %v422, %v428
        %v442 = vmul.f32 %v418, %v432
        %443 = vst [vmem:[#allocation2] sm:$0xff] %v435
        %444 = vst [vmem:[#allocation2 + $0x8] sm:$0xff] %v436
        %445 = vst [vmem:[#allocation2 + $0x10] sm:$0xff] %v437
        %446 = vst [vmem:[#allocation2 + $0x18] sm:$0xff] %v438
        %447 = vst [vmem:[#allocation2 + $0x20] sm:$0xff] %v439
        %448 = vst [vmem:[#allocation2 + $0x28] sm:$0xff] %v440
        %449 = vst [vmem:[#allocation2 + $0x30] sm:$0xff] %v441
        %450 = vst [vmem:[#allocation2 + $0x38] sm:$0xff] %v442
        %451 = vrot.lane.b32.xlu0 %v388, 16
        %v452 = vpop.permute.xlu0 %451
        %453 = vrot.lane.b32.xlu0 %v390, 16
        %v454 = vpop.permute.xlu0 %453
        %455 = vrot.lane.b32.xlu0 %v392, 16
        %v456 = vpop.permute.xlu0 %455
        %457 = vrot.lane.b32.xlu0 %v394, 16
        %v458 = vpop.permute.xlu0 %457
        %459 = vrot.lane.b32.xlu0 %v389, 16
        %v460 = vpop.permute.xlu0 %459
        %461 = vrot.lane.b32.xlu0 %v391, 16
        %v462 = vpop.permute.xlu0 %461
        %463 = vrot.lane.b32.xlu0 %v393, 16
        %v464 = vpop.permute.xlu0 %463
        %465 = vrot.lane.b32.xlu0 %v395, 16
        %v466 = vpop.permute.xlu0 %465
        %vm467 = vcmp.lt.s32.totalorder %v413, 16
        %v468 = vsel %vm467, %v452, %v460
        %v469 = vsel %vm467, %v454, %v462
        %v470 = vsel %vm467, %v456, %v464
        %v471 = vsel %vm467, %v458, %v466
        %v472 = vsel %vm467, %v460, %v452
        %v473 = vsel %vm467, %v462, %v454
        %v474 = vsel %vm467, %v464, %v456
        %v475 = vsel %vm467, %v466, %v458
        %s476 = scalar_lea.vmem %s1, 1
        %v477 = vld [vmem:[%s476] ss:$8 sm:$0x3]
        %v479 = vlaneseq
        %v480 = vshrl.u32 %v479, 7
        %v481 = vsub.s32 0, %v480
        %v482 = vrot.slane %v477, %v481
        %v483 = vlaneseq
        %v484 = vshrl.u32 %v483, 7
        %v485 = vsub.s32 1, %v484
        %v486 = vrot.slane %v477, %v485
        %v489 = vmul.f32 %v472, %v482
        %v490 = vmul.f32 %v468, %v486
        %v491 = vmul.f32 %v473, %v482
        %v492 = vmul.f32 %v469, %v486
        %v493 = vmul.f32 %v474, %v482
        %v494 = vmul.f32 %v470, %v486
        %v495 = vmul.f32 %v475, %v482
        %v496 = vmul.f32 %v471, %v486
        %497 = vst [vmem:[#allocation2 + $0x40] sm:$0xff] %v489
        %498 = vst [vmem:[#allocation2 + $0x48] sm:$0xff] %v490
        %499 = vst [vmem:[#allocation2 + $0x50] sm:$0xff] %v491
        %500 = vst [vmem:[#allocation2 + $0x58] sm:$0xff] %v492
        %501 = vst [vmem:[#allocation2 + $0x60] sm:$0xff] %v493
        %502 = vst [vmem:[#allocation2 + $0x68] sm:$0xff] %v494
        %503 = vst [vmem:[#allocation2 + $0x70] sm:$0xff] %v495
        %504 = vst [vmem:[#allocation2 + $0x78] sm:$0xff] %v496
        %505 = vrot.lane.b32.xlu0 %v388, 15
        %v506 = vpop.permute.xlu0 %505
        %507 = vrot.lane.b32.xlu0 %v390, 15
        %v508 = vpop.permute.xlu0 %507
        %509 = vrot.lane.b32.xlu0 %v392, 15
        %v510 = vpop.permute.xlu0 %509
        %511 = vrot.lane.b32.xlu0 %v394, 15
        %v512 = vpop.permute.xlu0 %511
        %513 = vrot.lane.b32.xlu0 %v389, 15
        %v514 = vpop.permute.xlu0 %513
        %515 = vrot.lane.b32.xlu0 %v391, 15
        %v516 = vpop.permute.xlu0 %515
        %517 = vrot.lane.b32.xlu0 %v393, 15
        %v518 = vpop.permute.xlu0 %517
        %519 = vrot.lane.b32.xlu0 %v395, 15
        %v520 = vpop.permute.xlu0 %519
        %vm521 = vcmp.lt.s32.totalorder %v413, 15
        %v522 = vsel %vm521, %v506, %v514
        %v523 = vsel %vm521, %v508, %v516
        %v524 = vsel %vm521, %v510, %v518
        %v525 = vsel %vm521, %v512, %v520
        %v526 = vsel %vm521, %v514, %v506
        %v527 = vsel %vm521, %v516, %v508
        %v528 = vsel %vm521, %v518, %v510
        %v529 = vsel %vm521, %v520, %v512
        %s530 = scalar_lea.vmem %s1, 2
        %v531 = vld [vmem:[%s530] ss:$8 sm:$0x3]
        %v533 = vlaneseq
        %v534 = vshrl.u32 %v533, 7
        %v535 = vsub.s32 0, %v534
        %v536 = vrot.slane %v531, %v535
        %v537 = vlaneseq
        %v538 = vshrl.u32 %v537, 7
        %v539 = vsub.s32 1, %v538
        %v540 = vrot.slane %v531, %v539
        %v543 = vmul.f32 %v526, %v536
        %v544 = vmul.f32 %v522, %v540
        %v545 = vmul.f32 %v527, %v536
        %v546 = vmul.f32 %v523, %v540
        %v547 = vmul.f32 %v528, %v536
        %v548 = vmul.f32 %v524, %v540
        %v549 = vmul.f32 %v529, %v536
        %v550 = vmul.f32 %v525, %v540
        %551 = vst [vmem:[#allocation2 + $0x80] sm:$0xff] %v543
        %552 = vst [vmem:[#allocation2 + $0x88] sm:$0xff] %v544
        %553 = vst [vmem:[#allocation2 + $0x90] sm:$0xff] %v545
        %554 = vst [vmem:[#allocation2 + $0x98] sm:$0xff] %v546
        %555 = vst [vmem:[#allocation2 + $0xa0] sm:$0xff] %v547
        %556 = vst [vmem:[#allocation2 + $0xa8] sm:$0xff] %v548
        %557 = vst [vmem:[#allocation2 + $0xb0] sm:$0xff] %v549
        %558 = vst [vmem:[#allocation2 + $0xb8] sm:$0xff] %v550
        %559 = vrot.lane.b32.xlu0 %v388, 1
        %v560 = vpop.permute.xlu0 %559
        %561 = vrot.lane.b32.xlu0 %v390, 1
        %v562 = vpop.permute.xlu0 %561
        %563 = vrot.lane.b32.xlu0 %v392, 1
        %v564 = vpop.permute.xlu0 %563
        %565 = vrot.lane.b32.xlu0 %v394, 1
        %v566 = vpop.permute.xlu0 %565
        %567 = vrot.lane.b32.xlu0 %v389, 1
        %v568 = vpop.permute.xlu0 %567
        %569 = vrot.lane.b32.xlu0 %v391, 1
        %v570 = vpop.permute.xlu0 %569
        %571 = vrot.lane.b32.xlu0 %v393, 1
        %v572 = vpop.permute.xlu0 %571
        %573 = vrot.lane.b32.xlu0 %v395, 1
        %v574 = vpop.permute.xlu0 %573
        %vm575 = vcmp.lt.s32.totalorder %v413, 1
        %v576 = vsel %vm575, %v560, %v568
        %v577 = vsel %vm575, %v562, %v570
        %v578 = vsel %vm575, %v564, %v572
        %v579 = vsel %vm575, %v566, %v574
        %v580 = vsel %vm575, %v568, %v560
        %v581 = vsel %vm575, %v570, %v562
        %v582 = vsel %vm575, %v572, %v564
        %v583 = vsel %vm575, %v574, %v566
        %s584 = scalar_lea.vmem %s1, 3
        %v585 = vld [vmem:[%s584] ss:$8 sm:$0x3]
        %v587 = vlaneseq
        %v588 = vshrl.u32 %v587, 7
        %v589 = vsub.s32 0, %v588
        %v590 = vrot.slane %v585, %v589
        %v591 = vlaneseq
        %v592 = vshrl.u32 %v591, 7
        %v593 = vsub.s32 1, %v592
        %v594 = vrot.slane %v585, %v593
        %v597 = vmul.f32 %v580, %v590
        %v598 = vmul.f32 %v576, %v594
        %v599 = vmul.f32 %v581, %v590
        %v600 = vmul.f32 %v577, %v594
        %v601 = vmul.f32 %v582, %v590
        %v602 = vmul.f32 %v578, %v594
        %v603 = vmul.f32 %v583, %v590
        %v604 = vmul.f32 %v579, %v594
        %605 = vst [vmem:[#allocation2 + $0xc0] sm:$0xff] %v597
        %606 = vst [vmem:[#allocation2 + $0xc8] sm:$0xff] %v598
        %607 = vst [vmem:[#allocation2 + $0xd0] sm:$0xff] %v599
        %608 = vst [vmem:[#allocation2 + $0xd8] sm:$0xff] %v600
        %609 = vst [vmem:[#allocation2 + $0xe0] sm:$0xff] %v601
        %610 = vst [vmem:[#allocation2 + $0xe8] sm:$0xff] %v602
        %611 = vst [vmem:[#allocation2 + $0xf0] sm:$0xff] %v603
        %612 = vst [vmem:[#allocation2 + $0xf8] sm:$0xff] %v604
        %s613 = scalar_lea.vmem %s1, 4
        %v614 = vld [vmem:[%s613] ss:$8 sm:$0x3]
        %v616 = vlaneseq
        %v617 = vshrl.u32 %v616, 7
        %v618 = vsub.s32 0, %v617
        %v619 = vrot.slane %v614, %v618
        %v620 = vlaneseq
        %v621 = vshrl.u32 %v620, 7
        %v622 = vsub.s32 1, %v621
        %v623 = vrot.slane %v614, %v622
        %v626 = vmul.f32 %v388, %v619
        %v627 = vmul.f32 %v389, %v623
        %v628 = vmul.f32 %v390, %v619
        %v629 = vmul.f32 %v391, %v623
        %v630 = vmul.f32 %v392, %v619
        %v631 = vmul.f32 %v393, %v623
        %v632 = vmul.f32 %v394, %v619
        %v633 = vmul.f32 %v395, %v623
        %634 = vst [vmem:[#allocation2 + $0x100] sm:$0xff] %v626
        %635 = vst [vmem:[#allocation2 + $0x108] sm:$0xff] %v627
        %636 = vst [vmem:[#allocation2 + $0x110] sm:$0xff] %v628
        %637 = vst [vmem:[#allocation2 + $0x118] sm:$0xff] %v629
        %638 = vst [vmem:[#allocation2 + $0x120] sm:$0xff] %v630
        %639 = vst [vmem:[#allocation2 + $0x128] sm:$0xff] %v631
        %640 = vst [vmem:[#allocation2 + $0x130] sm:$0xff] %v632
        %641 = vst [vmem:[#allocation2 + $0x138] sm:$0xff] %v633
        %642 = vrot.lane.b32.xlu0 %v388, 127
        %v643 = vpop.permute.xlu0 %642
        %644 = vrot.lane.b32.xlu0 %v390, 127
        %v645 = vpop.permute.xlu0 %644
        %646 = vrot.lane.b32.xlu0 %v392, 127
        %v647 = vpop.permute.xlu0 %646
        %648 = vrot.lane.b32.xlu0 %v394, 127
        %v649 = vpop.permute.xlu0 %648
        %650 = vrot.lane.b32.xlu0 %v389, 127
        %v651 = vpop.permute.xlu0 %650
        %652 = vrot.lane.b32.xlu0 %v391, 127
        %v653 = vpop.permute.xlu0 %652
        %654 = vrot.lane.b32.xlu0 %v393, 127
        %v655 = vpop.permute.xlu0 %654
        %656 = vrot.lane.b32.xlu0 %v395, 127
        %v657 = vpop.permute.xlu0 %656
        %vm658 = vcmp.lt.s32.totalorder %v413, 127
        %v659 = vsel %vm658, %v643, %v651
        %v660 = vsel %vm658, %v645, %v653
        %v661 = vsel %vm658, %v647, %v655
        %v662 = vsel %vm658, %v649, %v657
        %v663 = vsel %vm658, %v651, %v643
        %v664 = vsel %vm658, %v653, %v645
        %v665 = vsel %vm658, %v655, %v647
        %v666 = vsel %vm658, %v657, %v649
        %s667 = scalar_lea.vmem %s1, 5
        %v668 = vld [vmem:[%s667] ss:$8 sm:$0x3]
        %v670 = vlaneseq
        %v671 = vshrl.u32 %v670, 7
        %v672 = vsub.s32 0, %v671
        %v673 = vrot.slane %v668, %v672
        %v674 = vlaneseq
        %v675 = vshrl.u32 %v674, 7
        %v676 = vsub.s32 1, %v675
        %v677 = vrot.slane %v668, %v676
        %v680 = vmul.f32 %v659, %v673
        %v681 = vmul.f32 %v663, %v677
        %v682 = vmul.f32 %v660, %v673
        %v683 = vmul.f32 %v664, %v677
        %v684 = vmul.f32 %v661, %v673
        %v685 = vmul.f32 %v665, %v677
        %v686 = vmul.f32 %v662, %v673
        %v687 = vmul.f32 %v666, %v677
        %688 = vst [vmem:[#allocation2 + $0x140] sm:$0xff] %v680
        %689 = vst [vmem:[#allocation2 + $0x148] sm:$0xff] %v681
        %690 = vst [vmem:[#allocation2 + $0x150] sm:$0xff] %v682
        %691 = vst [vmem:[#allocation2 + $0x158] sm:$0xff] %v683
        %692 = vst [vmem:[#allocation2 + $0x160] sm:$0xff] %v684
        %693 = vst [vmem:[#allocation2 + $0x168] sm:$0xff] %v685
        %694 = vst [vmem:[#allocation2 + $0x170] sm:$0xff] %v686
        %695 = vst [vmem:[#allocation2 + $0x178] sm:$0xff] %v687
        %696 = vrot.lane.b32.xlu0 %v388, 113
        %v697 = vpop.permute.xlu0 %696
        %698 = vrot.lane.b32.xlu0 %v390, 113
        %v699 = vpop.permute.xlu0 %698
        %700 = vrot.lane.b32.xlu0 %v392, 113
        %v701 = vpop.permute.xlu0 %700
        %702 = vrot.lane.b32.xlu0 %v394, 113
        %v703 = vpop.permute.xlu0 %702
        %704 = vrot.lane.b32.xlu0 %v389, 113
        %v705 = vpop.permute.xlu0 %704
        %706 = vrot.lane.b32.xlu0 %v391, 113
        %v707 = vpop.permute.xlu0 %706
        %708 = vrot.lane.b32.xlu0 %v393, 113
        %v709 = vpop.permute.xlu0 %708
        %710 = vrot.lane.b32.xlu0 %v395, 113
        %v711 = vpop.permute.xlu0 %710
        %vm712 = vcmp.lt.s32.totalorder %v413, 113
        %v713 = vsel %vm712, %v697, %v705
        %v714 = vsel %vm712, %v699, %v707
        %v715 = vsel %vm712, %v701, %v709
        %v716 = vsel %vm712, %v703, %v711
        %v717 = vsel %vm712, %v705, %v697
        %v718 = vsel %vm712, %v707, %v699
        %v719 = vsel %vm712, %v709, %v701
        %v720 = vsel %vm712, %v711, %v703
        %s721 = scalar_lea.vmem %s1, 6
        %v722 = vld [vmem:[%s721] ss:$8 sm:$0x3]
        %v724 = vlaneseq
        %v725 = vshrl.u32 %v724, 7
        %v726 = vsub.s32 0, %v725
        %v727 = vrot.slane %v722, %v726
        %v728 = vlaneseq
        %v729 = vshrl.u32 %v728, 7
        %v730 = vsub.s32 1, %v729
        %v731 = vrot.slane %v722, %v730
        %v734 = vmul.f32 %v713, %v727
        %v735 = vmul.f32 %v717, %v731
        %v736 = vmul.f32 %v714, %v727
        %v737 = vmul.f32 %v718, %v731
        %v738 = vmul.f32 %v715, %v727
        %v739 = vmul.f32 %v719, %v731
        %v740 = vmul.f32 %v716, %v727
        %v741 = vmul.f32 %v720, %v731
        %742 = vst [vmem:[#allocation2 + $0x180] sm:$0xff] %v734
        %743 = vst [vmem:[#allocation2 + $0x188] sm:$0xff] %v735
        %744 = vst [vmem:[#allocation2 + $0x190] sm:$0xff] %v736
        %745 = vst [vmem:[#allocation2 + $0x198] sm:$0xff] %v737
        %746 = vst [vmem:[#allocation2 + $0x1a0] sm:$0xff] %v738
        %747 = vst [vmem:[#allocation2 + $0x1a8] sm:$0xff] %v739
        %748 = vst [vmem:[#allocation2 + $0x1b0] sm:$0xff] %v740
        %749 = vst [vmem:[#allocation2 + $0x1b8] sm:$0xff] %v741
        %750 = vrot.lane.b32.xlu0 %v388, 112
        %v751 = vpop.permute.xlu0 %750
        %752 = vrot.lane.b32.xlu0 %v390, 112
        %v753 = vpop.permute.xlu0 %752
        %754 = vrot.lane.b32.xlu0 %v392, 112
        %v755 = vpop.permute.xlu0 %754
        %756 = vrot.lane.b32.xlu0 %v394, 112
        %v757 = vpop.permute.xlu0 %756
        %758 = vrot.lane.b32.xlu0 %v389, 112
        %v759 = vpop.permute.xlu0 %758
        %760 = vrot.lane.b32.xlu0 %v391, 112
        %v761 = vpop.permute.xlu0 %760
        %762 = vrot.lane.b32.xlu0 %v393, 112
        %v763 = vpop.permute.xlu0 %762
        %764 = vrot.lane.b32.xlu0 %v395, 112
        %v765 = vpop.permute.xlu0 %764
        %vm766 = vcmp.lt.s32.totalorder %v413, 112
        %v767 = vsel %vm766, %v751, %v759
        %v768 = vsel %vm766, %v753, %v761
        %v769 = vsel %vm766, %v755, %v763
        %v770 = vsel %vm766, %v757, %v765
        %v771 = vsel %vm766, %v759, %v751
        %v772 = vsel %vm766, %v761, %v753
        %v773 = vsel %vm766, %v763, %v755
        %v774 = vsel %vm766, %v765, %v757
        %s775 = scalar_lea.vmem %s1, 7
        %v776 = vld [vmem:[%s775] ss:$8 sm:$0x3]
        %v778 = vlaneseq
        %v779 = vshrl.u32 %v778, 7
        %v780 = vsub.s32 0, %v779
        %v781 = vrot.slane %v776, %v780
        %v782 = vlaneseq
        %v783 = vshrl.u32 %v782, 7
        %v784 = vsub.s32 1, %v783
        %v785 = vrot.slane %v776, %v784
        %v788 = vmul.f32 %v767, %v781
        %v789 = vmul.f32 %v771, %v785
        %v790 = vmul.f32 %v768, %v781
        %v791 = vmul.f32 %v772, %v785
        %v792 = vmul.f32 %v769, %v781
        %v793 = vmul.f32 %v773, %v785
        %v794 = vmul.f32 %v770, %v781
        %v795 = vmul.f32 %v774, %v785
        %796 = vst [vmem:[#allocation2 + $0x1c0] sm:$0xff] %v788
        %797 = vst [vmem:[#allocation2 + $0x1c8] sm:$0xff] %v789
        %798 = vst [vmem:[#allocation2 + $0x1d0] sm:$0xff] %v790
        %799 = vst [vmem:[#allocation2 + $0x1d8] sm:$0xff] %v791
        %800 = vst [vmem:[#allocation2 + $0x1e0] sm:$0xff] %v792
        %801 = vst [vmem:[#allocation2 + $0x1e8] sm:$0xff] %v793
        %802 = vst [vmem:[#allocation2 + $0x1f0] sm:$0xff] %v794
        %803 = vst [vmem:[#allocation2 + $0x1f8] sm:$0xff] %v795
        %804 = vrot.lane.b32.xlu0 %v388, 111
        %v805 = vpop.permute.xlu0 %804
        %806 = vrot.lane.b32.xlu0 %v390, 111
        %v807 = vpop.permute.xlu0 %806
        %808 = vrot.lane.b32.xlu0 %v392, 111
        %v809 = vpop.permute.xlu0 %808
        %810 = vrot.lane.b32.xlu0 %v394, 111
        %v811 = vpop.permute.xlu0 %810
        %812 = vrot.lane.b32.xlu0 %v389, 111
        %v813 = vpop.permute.xlu0 %812
        %814 = vrot.lane.b32.xlu0 %v391, 111
        %v815 = vpop.permute.xlu0 %814
        %816 = vrot.lane.b32.xlu0 %v393, 111
        %v817 = vpop.permute.xlu0 %816
        %818 = vrot.lane.b32.xlu0 %v395, 111
        %v819 = vpop.permute.xlu0 %818
        %vm820 = vcmp.lt.s32.totalorder %v413, 111
        %v821 = vsel %vm820, %v805, %v813
        %v822 = vsel %vm820, %v807, %v815
        %v823 = vsel %vm820, %v809, %v817
        %v824 = vsel %vm820, %v811, %v819
        %v825 = vsel %vm820, %v813, %v805
        %v826 = vsel %vm820, %v815, %v807
        %v827 = vsel %vm820, %v817, %v809
        %v828 = vsel %vm820, %v819, %v811
        %s829 = scalar_lea.vmem %s1, 16
        %v830 = vld [vmem:[%s829] ss:$8 sm:$0x3]
        %v832 = vlaneseq
        %v833 = vshrl.u32 %v832, 7
        %v834 = vsub.s32 0, %v833
        %v835 = vrot.slane %v830, %v834
        %v836 = vlaneseq
        %v837 = vshrl.u32 %v836, 7
        %v838 = vsub.s32 1, %v837
        %v839 = vrot.slane %v830, %v838
        %v842 = vmul.f32 %v821, %v835
        %v843 = vmul.f32 %v825, %v839
        %v844 = vmul.f32 %v822, %v835
        %v845 = vmul.f32 %v826, %v839
        %v846 = vmul.f32 %v823, %v835
        %v847 = vmul.f32 %v827, %v839
        %v848 = vmul.f32 %v824, %v835
        %v849 = vmul.f32 %v828, %v839
        %850 = vst [vmem:[#allocation2 + $0x200] sm:$0xff] %v842
        %851 = vst [vmem:[#allocation2 + $0x208] sm:$0xff] %v843
        %852 = vst [vmem:[#allocation2 + $0x210] sm:$0xff] %v844
        %853 = vst [vmem:[#allocation2 + $0x218] sm:$0xff] %v845
        %854 = vst [vmem:[#allocation2 + $0x220] sm:$0xff] %v846
        %855 = vst [vmem:[#allocation2 + $0x228] sm:$0xff] %v847
        %856 = vst [vmem:[#allocation2 + $0x230] sm:$0xff] %v848
        %857 = vst [vmem:[#allocation2 + $0x238] sm:$0xff] %v849
        %v858 = vld [vmem:[#allocation3] sm:$0xff]
        %v859 = vld [vmem:[#allocation3 + $0x8] sm:$0xff]
        %v860 = vld [vmem:[#allocation3 + $0x10] sm:$0xff]
        %v861 = vld [vmem:[#allocation3 + $0x18] sm:$0xff]
        %v862 = vld [vmem:[#allocation3 + $0x20] sm:$0xff]
        %v863 = vld [vmem:[#allocation3 + $0x28] sm:$0xff]
        %v864 = vld [vmem:[#allocation3 + $0x30] sm:$0xff]
        %v865 = vld [vmem:[#allocation3 + $0x38] sm:$0xff]
        %v866 = vld [vmem:[#allocation3 + $0x40] sm:$0xff]
        %v867 = vld [vmem:[#allocation3 + $0x48] sm:$0xff]
        %v868 = vld [vmem:[#allocation3 + $0x50] sm:$0xff]
        %v869 = vld [vmem:[#allocation3 + $0x58] sm:$0xff]
        %v870 = vld [vmem:[#allocation2] sm:$0xff]
        %v871 = vld [vmem:[#allocation2 + $0x8] sm:$0xff]
        %v872 = vld [vmem:[#allocation2 + $0x10] sm:$0xff]
        %v873 = vld [vmem:[#allocation2 + $0x18] sm:$0xff]
        %v874 = vld [vmem:[#allocation2 + $0x20] sm:$0xff]
        %v875 = vld [vmem:[#allocation2 + $0x28] sm:$0xff]
        %v876 = vld [vmem:[#allocation2 + $0x30] sm:$0xff]
        %v877 = vld [vmem:[#allocation2 + $0x38] sm:$0xff]
        %v878 = vld [vmem:[#allocation2 + $0x40] sm:$0xff]
        %v879 = vld [vmem:[#allocation2 + $0x48] sm:$0xff]
        %v880 = vld [vmem:[#allocation2 + $0x50] sm:$0xff]
        %v881 = vld [vmem:[#allocation2 + $0x58] sm:$0xff]
        %v882 = vld [vmem:[#allocation2 + $0x60] sm:$0xff]
        %v883 = vld [vmem:[#allocation2 + $0x68] sm:$0xff]
        %v884 = vld [vmem:[#allocation2 + $0x70] sm:$0xff]
        %v885 = vld [vmem:[#allocation2 + $0x78] sm:$0xff]
        %v886 = vld [vmem:[#allocation2 + $0x80] sm:$0xff]
        %v887 = vld [vmem:[#allocation2 + $0x88] sm:$0xff]
        %v888 = vld [vmem:[#allocation2 + $0x90] sm:$0xff]
        %v889 = vld [vmem:[#allocation2 + $0x98] sm:$0xff]
        %v890 = vld [vmem:[#allocation2 + $0xa0] sm:$0xff]
        %v891 = vld [vmem:[#allocation2 + $0xa8] sm:$0xff]
        %v892 = vld [vmem:[#allocation2 + $0xb0] sm:$0xff]
        %v893 = vld [vmem:[#allocation2 + $0xb8] sm:$0xff]
        %v894 = vld [vmem:[#allocation2 + $0xc0] sm:$0xff]
        %v895 = vld [vmem:[#allocation2 + $0xc8] sm:$0xff]
        %v896 = vld [vmem:[#allocation2 + $0xd0] sm:$0xff]
        %v897 = vld [vmem:[#allocation2 + $0xd8] sm:$0xff]
        %v898 = vld [vmem:[#allocation2 + $0xe0] sm:$0xff]
        %v899 = vld [vmem:[#allocation2 + $0xe8] sm:$0xff]
        %v900 = vld [vmem:[#allocation2 + $0xf0] sm:$0xff]
        %v901 = vld [vmem:[#allocation2 + $0xf8] sm:$0xff]
        %v902 = vld [vmem:[#allocation2 + $0x100] sm:$0xff]
        %v903 = vld [vmem:[#allocation2 + $0x108] sm:$0xff]
        %v904 = vld [vmem:[#allocation2 + $0x110] sm:$0xff]
        %v905 = vld [vmem:[#allocation2 + $0x118] sm:$0xff]
        %v906 = vld [vmem:[#allocation2 + $0x120] sm:$0xff]
        %v907 = vld [vmem:[#allocation2 + $0x128] sm:$0xff]
        %v908 = vld [vmem:[#allocation2 + $0x130] sm:$0xff]
        %v909 = vld [vmem:[#allocation2 + $0x138] sm:$0xff]
        %v910 = vld [vmem:[#allocation2 + $0x140] sm:$0xff]
        %v911 = vld [vmem:[#allocation2 + $0x148] sm:$0xff]
        %v912 = vld [vmem:[#allocation2 + $0x150] sm:$0xff]
        %v913 = vld [vmem:[#allocation2 + $0x158] sm:$0xff]
        %v914 = vld [vmem:[#allocation2 + $0x160] sm:$0xff]
        %v915 = vld [vmem:[#allocation2 + $0x168] sm:$0xff]
        %v916 = vld [vmem:[#allocation2 + $0x170] sm:$0xff]
        %v917 = vld [vmem:[#allocation2 + $0x178] sm:$0xff]
        %v918 = vld [vmem:[#allocation2 + $0x180] sm:$0xff]
        %v919 = vld [vmem:[#allocation2 + $0x188] sm:$0xff]
        %v920 = vld [vmem:[#allocation2 + $0x190] sm:$0xff]
        %v921 = vld [vmem:[#allocation2 + $0x198] sm:$0xff]
        %v922 = vld [vmem:[#allocation2 + $0x1a0] sm:$0xff]
        %v923 = vld [vmem:[#allocation2 + $0x1a8] sm:$0xff]
        %v924 = vld [vmem:[#allocation2 + $0x1b0] sm:$0xff]
        %v925 = vld [vmem:[#allocation2 + $0x1b8] sm:$0xff]
        %v926 = vld [vmem:[#allocation2 + $0x1c0] sm:$0xff]
        %v927 = vld [vmem:[#allocation2 + $0x1c8] sm:$0xff]
        %v928 = vld [vmem:[#allocation2 + $0x1d0] sm:$0xff]
        %v929 = vld [vmem:[#allocation2 + $0x1d8] sm:$0xff]
        %v930 = vld [vmem:[#allocation2 + $0x1e0] sm:$0xff]
        %v931 = vld [vmem:[#allocation2 + $0x1e8] sm:$0xff]
        %v932 = vld [vmem:[#allocation2 + $0x1f0] sm:$0xff]
        %v933 = vld [vmem:[#allocation2 + $0x1f8] sm:$0xff]
        %v934 = vld [vmem:[#allocation2 + $0x200] sm:$0xff]
        %v935 = vld [vmem:[#allocation2 + $0x208] sm:$0xff]
        %v936 = vld [vmem:[#allocation2 + $0x210] sm:$0xff]
        %v937 = vld [vmem:[#allocation2 + $0x218] sm:$0xff]
        %v938 = vld [vmem:[#allocation2 + $0x220] sm:$0xff]
        %v939 = vld [vmem:[#allocation2 + $0x228] sm:$0xff]
        %v940 = vld [vmem:[#allocation2 + $0x230] sm:$0xff]
        %v941 = vld [vmem:[#allocation2 + $0x238] sm:$0xff]
        %v942 = vld [vmem:[%s3] sm:$0xff]
        %v943 = vld [vmem:[%s3 + $0x8] sm:$0xff]
        %v944 = vld [vmem:[%s3 + $0x10] sm:$0xff]
        %v945 = vld [vmem:[%s3 + $0x18] sm:$0xff]
        %947 = vset.pattern.permute.xlu0 0
        %948 = vperm.xlu0 %947, %v942
        %v949 = vpop.permute.xlu0 %948
        %952 = vset.pattern.permute.xlu0 0
        %953 = vperm.xlu0 %952, %v943
        %v954 = vpop.permute.xlu0 %953
        %957 = vset.pattern.permute.xlu0 0
        %958 = vperm.xlu0 %957, %v944
        %v959 = vpop.permute.xlu0 %958
        %962 = vset.pattern.permute.xlu0 0
        %963 = vperm.xlu0 %962, %v945
        %v964 = vpop.permute.xlu0 %963
        %vm966 = vcmask 261120
        %v968 = vsel %vm966, %v860, 0
        %v971 = vsel %vm966, %v863, 0
        %v974 = vsel %vm966, %v866, 0
        %v977 = vsel %vm966, %v869, 0
        %979 = vmatprep.subr.mxu0 %v871
        %980 = vmatpush1.msra.mxu0 %v870
        %981 = vmatprep.subr.mxu0 %v873
        %982 = vmatpush1.msra.mxu0 %v872
        %983 = vmatprep.subr.mxu0 %v875
        %984 = vmatpush1.msra.mxu0 %v874
        %985 = vmatprep.subr.mxu0 %v877
        %986 = vmatpush1.msra.mxu0 %v876
        %987 = vmatprep.subr.mxu0 %v879
        %988 = vmatpush1.msra.mxu0 %v878
        %989 = vmatprep.subr.mxu0 %v881
        %990 = vmatpush1.msra.mxu0 %v880
        %991 = vmatprep.subr.mxu0 %v883
        %992 = vmatpush1.msra.mxu0 %v882
        %993 = vmatprep.subr.mxu0 %v885
        %994 = vmatpush1.msra.mxu0 %v884
        %995 = vmatprep.subr.mxu0 %v887
        %996 = vmatpush1.msra.mxu0 %v886
        %997 = vmatprep.subr.mxu0 %v889
        %998 = vmatpush1.msra.mxu0 %v888
        %999 = vmatprep.subr.mxu0 %v891
        %1000 = vmatpush1.msra.mxu0 %v890
        %1001 = vmatprep.subr.mxu0 %v893
        %1002 = vmatpush1.msra.mxu0 %v892
        %1003 = vmatprep.subr.mxu0 %v895
        %1004 = vmatpush1.msra.mxu0 %v894
        %1005 = vmatprep.subr.mxu0 %v897
        %1006 = vmatpush1.msra.mxu0 %v896
        %1007 = vmatprep.subr.mxu0 %v899
        %1008 = vmatpush1.msra.mxu0 %v898
        %1009 = vmatprep.subr.mxu0 %v901
        %1010 = vmatpush1.msra.mxu0 %v900
        %1011 = vmatprep.subr.mxu0 %v903
        %1012 = vmatpush1.msra.mxu0 %v902
        %1013 = vmatprep.subr.mxu0 %v905
        %1014 = vmatpush1.msra.mxu0 %v904
        %1015 = vmatprep.subr.mxu0 %v907
        %1016 = vmatpush1.msra.mxu0 %v906
        %1017 = vmatprep.subr.mxu0 %v909
        %1018 = vmatpush1.msra.mxu0 %v908
        %1019 = vmatprep.subr.mxu0 %v911
        %1020 = vmatpush1.msra.mxu0 %v910
        %1021 = vmatprep.subr.mxu0 %v913
        %1022 = vmatpush1.msra.mxu0 %v912
        %1023 = vmatprep.subr.mxu0 %v915
        %1024 = vmatpush1.msra.mxu0 %v914
        %1025 = vmatprep.subr.mxu0 %v917
        %1026 = vmatpush1.msra.mxu0 %v916
        %1027 = vmatprep.subr.mxu0 %v919
        %1028 = vmatpush1.msra.mxu0 %v918
        %1029 = vmatprep.subr.mxu0 %v921
        %1030 = vmatpush1.msra.mxu0 %v920
        %1031 = vmatprep.subr.mxu0 %v923
        %1032 = vmatpush1.msra.mxu0 %v922
        %1033 = vmatprep.subr.mxu0 %v925
        %1034 = vmatpush1.msra.mxu0 %v924
        %1035 = vmatprep.subr.mxu0 %v927
        %1036 = vmatpush1.msra.mxu0 %v926
        %1037 = vmatprep.subr.mxu0 %v929
        %1038 = vmatpush1.msra.mxu0 %v928
        %1039 = vmatprep.subr.mxu0 %v931
        %1040 = vmatpush1.msra.mxu0 %v930
        %1041 = vmatprep.subr.mxu0 %v933
        %1042 = vmatpush1.msra.mxu0 %v932
        %1043 = vmatprep.mubr.f32.mxu0 %v859
        %1044 = vmatmul.mubr.f32.gmra.mrb[0].mxu0 %v858
        %v1045 = vpop.f32.mrb[0].mxu0
        %v1046 = vadd.f32 %v949, %v1045
        %v1047 = vpop.f32.mrb[0].mxu0
        %v1048 = vadd.f32 %v949, %v1047
        %1049 = vmatprep.mubr.f32.mxu0 %v862
        %1050 = vmatmul.mubr.f32.gmra.mrb[0].mxu0 %v861
        %v1051 = vpop.f32.mrb[0].mxu0
        %v1052 = vadd.f32 %v954, %v1051
        %v1053 = vpop.f32.mrb[0].mxu0
        %v1054 = vadd.f32 %v954, %v1053
        %1055 = vmatprep.mubr.f32.mxu0 %v865
        %1056 = vmatmul.mubr.f32.gmra.mrb[0].mxu0 %v864
        %v1057 = vpop.f32.mrb[0].mxu0
        %v1058 = vadd.f32 %v959, %v1057
        %v1059 = vpop.f32.mrb[0].mxu0
        %v1060 = vadd.f32 %v959, %v1059
        %1061 = vmatprep.mubr.f32.mxu0 %v868
        %1062 = vmatmul.mubr.f32.gmra.mrb[0].mxu0 %v867
        %v1063 = vpop.f32.mrb[0].mxu0
        %v1064 = vadd.f32 %v964, %v1063
        %v1065 = vpop.f32.mrb[0].mxu0
        %v1066 = vadd.f32 %v964, %v1065
        %1067 = vdwg.mxu0
        %1068 = vmatprep.subr.mxu0 %v935
        %1069 = vmatpush1.msra.mxu0 %v934
        %1070 = vmatprep.subr.mxu0 %v937
        %1071 = vmatpush1.msra.mxu0 %v936
        %1072 = vmatprep.subr.mxu0 %v939
        %1073 = vmatpush1.msra.mxu0 %v938
        %1074 = vmatprep.subr.mxu0 %v941
        %1075 = vmatpush1.msra.mxu0 %v940
        %1076 = vmatprep.subr.mxu0 0.0
        %1077 = vmatpush1.msra.mxu0 0.0
        %1078 = vmatprep.subr.mxu0 0.0
        %1079 = vmatpush1.msra.mxu0 0.0
        %1080 = vmatprep.subr.mxu0 0.0
        %1081 = vmatpush1.msra.mxu0 0.0
        %1082 = vmatprep.subr.mxu0 0.0
        %1083 = vmatpush1.msra.mxu0 0.0
        %1084 = vmatprep.subr.mxu0 0.0
        %1085 = vmatpush1.msra.mxu0 0.0
        %1086 = vmatprep.subr.mxu0 0.0
        %1087 = vmatpush1.msra.mxu0 0.0
        %1088 = vmatprep.subr.mxu0 0.0
        %1089 = vmatpush1.msra.mxu0 0.0
        %1090 = vmatprep.subr.mxu0 0.0
        %1091 = vmatpush1.msra.mxu0 0.0
        %1092 = vmatprep.subr.mxu0 0.0
        %1093 = vmatpush1.msra.mxu0 0.0
        %1094 = vmatprep.subr.mxu0 0.0
        %1095 = vmatpush1.msra.mxu0 0.0
        %1096 = vmatprep.subr.mxu0 0.0
        %1097 = vmatpush1.msra.mxu0 0.0
        %1098 = vmatprep.subr.mxu0 0.0
        %1099 = vmatpush1.msra.mxu0 0.0
        %1100 = vmatprep.subr.mxu0 0.0
        %1101 = vmatpush1.msra.mxu0 0.0
        %1102 = vmatprep.subr.mxu0 0.0
        %1103 = vmatpush1.msra.mxu0 0.0
        %1104 = vmatprep.subr.mxu0 0.0
        %1105 = vmatpush1.msra.mxu0 0.0
        %1106 = vmatprep.subr.mxu0 0.0
        %1107 = vmatpush1.msra.mxu0 0.0
        %1108 = vmatprep.subr.mxu0 0.0
        %1109 = vmatpush1.msra.mxu0 0.0
        %1110 = vmatprep.subr.mxu0 0.0
        %1111 = vmatpush1.msra.mxu0 0.0
        %1112 = vmatprep.subr.mxu0 0.0
        %1113 = vmatpush1.msra.mxu0 0.0
        %1114 = vmatprep.subr.mxu0 0.0
        %1115 = vmatpush1.msra.mxu0 0.0
        %1116 = vmatprep.subr.mxu0 0.0
        %1117 = vmatpush1.msra.mxu0 0.0
        %1118 = vmatprep.subr.mxu0 0.0
        %1119 = vmatpush1.msra.mxu0 0.0
        %1120 = vmatprep.subr.mxu0 0.0
        %1121 = vmatpush1.msra.mxu0 0.0
        %1122 = vmatprep.subr.mxu0 0.0
        %1123 = vmatpush1.msra.mxu0 0.0
        %1124 = vmatprep.subr.mxu0 0.0
        %1125 = vmatpush1.msra.mxu0 0.0
        %1126 = vmatprep.subr.mxu0 0.0
        %1127 = vmatpush1.msra.mxu0 0.0
        %1128 = vmatprep.subr.mxu0 0.0
        %1129 = vmatpush1.msra.mxu0 0.0
        %1130 = vmatprep.subr.mxu0 0.0
        %1131 = vmatpush1.msra.mxu0 0.0
        %1132 = vmatprep.mubr.f32.mxu0 0.0
        %1133 = vmatmul.mubr.f32.gmra.mrb[0].mxu0 %v968
        %v1134 = vpop.f32.mrb[0].mxu0
        %v1135 = vadd.f32 %v1046, %v1134
        %v1136 = vpop.f32.mrb[0].mxu0
        %v1137 = vadd.f32 %v1048, %v1136
        %1138 = vmatprep.mubr.f32.mxu0 0.0
        %1139 = vmatmul.mubr.f32.gmra.mrb[0].mxu0 %v971
        %v1140 = vpop.f32.mrb[0].mxu0
        %v1141 = vadd.f32 %v1052, %v1140
        %v1142 = vpop.f32.mrb[0].mxu0
        %v1143 = vadd.f32 %v1054, %v1142
        %1144 = vmatprep.mubr.f32.mxu0 0.0
        %1145 = vmatmul.mubr.f32.gmra.mrb[0].mxu0 %v974
        %v1146 = vpop.f32.mrb[0].mxu0
        %v1147 = vadd.f32 %v1058, %v1146
        %v1148 = vpop.f32.mrb[0].mxu0
        %v1149 = vadd.f32 %v1060, %v1148
        %1150 = vmatprep.mubr.f32.mxu0 0.0
        %1151 = vmatmul.mubr.f32.gmra.mrb[0].mxu0 %v977
        %v1152 = vpop.f32.mrb[0].mxu0
        %v1153 = vadd.f32 %v1064, %v1152
        %v1154 = vpop.f32.mrb[0].mxu0
        %v1155 = vadd.f32 %v1066, %v1154
        %1156 = vdwg.mxu0
        %v1157 = vmax.f32 %v1135, 0.0
        %v1158 = vmax.f32 %v1137, 0.0
        %v1159 = vmax.f32 %v1141, 0.0
        %v1160 = vmax.f32 %v1143, 0.0
        %v1161 = vmax.f32 %v1147, 0.0
        %v1162 = vmax.f32 %v1149, 0.0
        %v1163 = vmax.f32 %v1153, 0.0
        %v1164 = vmax.f32 %v1155, 0.0
        %1165 = vrot.lane.b32.xlu0 %v1157, 17
        %v1166 = vpop.permute.xlu0 %1165
        %1167 = vrot.lane.b32.xlu0 %v1159, 17
        %v1168 = vpop.permute.xlu0 %1167
        %1169 = vrot.lane.b32.xlu0 %v1161, 17
        %v1170 = vpop.permute.xlu0 %1169
        %1171 = vrot.lane.b32.xlu0 %v1163, 17
        %v1172 = vpop.permute.xlu0 %1171
        %1173 = vrot.lane.b32.xlu0 %v1158, 17
        %v1174 = vpop.permute.xlu0 %1173
        %1175 = vrot.lane.b32.xlu0 %v1160, 17
        %v1176 = vpop.permute.xlu0 %1175
        %1177 = vrot.lane.b32.xlu0 %v1162, 17
        %v1178 = vpop.permute.xlu0 %1177
        %1179 = vrot.lane.b32.xlu0 %v1164, 17
        %v1180 = vpop.permute.xlu0 %1179
        %v1181 = vsel %vm414, %v1166, %v1174
        %v1182 = vsel %vm414, %v1168, %v1176
        %v1183 = vsel %vm414, %v1170, %v1178
        %v1184 = vsel %vm414, %v1172, %v1180
        %v1185 = vsel %vm414, %v1174, %v1166
        %v1186 = vsel %vm414, %v1176, %v1168
        %v1187 = vsel %vm414, %v1178, %v1170
        %v1188 = vsel %vm414, %v1180, %v1172
        %v1189 = vld [vmem:[%s1] ss:$8 sm:$0x3]
        %v1191 = vlaneseq
        %v1192 = vshrl.u32 %v1191, 7
        %v1193 = vsub.s32 0, %v1192
        %v1194 = vrot.slane %v1189, %v1193
        %v1195 = vlaneseq
        %v1196 = vshrl.u32 %v1195, 7
        %v1197 = vsub.s32 1, %v1196
        %v1198 = vrot.slane %v1189, %v1197
        %v1201 = vmul.f32 %v1185, %v1194
        %v1202 = vmul.f32 %v1181, %v1198
        %v1203 = vmul.f32 %v1186, %v1194
        %v1204 = vmul.f32 %v1182, %v1198
        %v1205 = vmul.f32 %v1187, %v1194
        %v1206 = vmul.f32 %v1183, %v1198
        %v1207 = vmul.f32 %v1188, %v1194
        %v1208 = vmul.f32 %v1184, %v1198
        %1209 = vst [vmem:[#allocation2] sm:$0xff] %v1201
        %1210 = vst [vmem:[#allocation2 + $0x8] sm:$0xff] %v1202
        %1211 = vst [vmem:[#allocation2 + $0x10] sm:$0xff] %v1203
        %1212 = vst [vmem:[#allocation2 + $0x18] sm:$0xff] %v1204
        %1213 = vst [vmem:[#allocation2 + $0x20] sm:$0xff] %v1205
        %1214 = vst [vmem:[#allocation2 + $0x28] sm:$0xff] %v1206
        %1215 = vst [vmem:[#allocation2 + $0x30] sm:$0xff] %v1207
        %1216 = vst [vmem:[#allocation2 + $0x38] sm:$0xff] %v1208
        %1217 = vrot.lane.b32.xlu0 %v1157, 16
        %v1218 = vpop.permute.xlu0 %1217
        %1219 = vrot.lane.b32.xlu0 %v1159, 16
        %v1220 = vpop.permute.xlu0 %1219
        %1221 = vrot.lane.b32.xlu0 %v1161, 16
        %v1222 = vpop.permute.xlu0 %1221
        %1223 = vrot.lane.b32.xlu0 %v1163, 16
        %v1224 = vpop.permute.xlu0 %1223
        %1225 = vrot.lane.b32.xlu0 %v1158, 16
        %v1226 = vpop.permute.xlu0 %1225
        %1227 = vrot.lane.b32.xlu0 %v1160, 16
        %v1228 = vpop.permute.xlu0 %1227
        %1229 = vrot.lane.b32.xlu0 %v1162, 16
        %v1230 = vpop.permute.xlu0 %1229
        %1231 = vrot.lane.b32.xlu0 %v1164, 16
        %v1232 = vpop.permute.xlu0 %1231
        %v1233 = vsel %vm467, %v1218, %v1226
        %v1234 = vsel %vm467, %v1220, %v1228
        %v1235 = vsel %vm467, %v1222, %v1230
        %v1236 = vsel %vm467, %v1224, %v1232
        %v1237 = vsel %vm467, %v1226, %v1218
        %v1238 = vsel %vm467, %v1228, %v1220
        %v1239 = vsel %vm467, %v1230, %v1222
        %v1240 = vsel %vm467, %v1232, %v1224
        %v1241 = vld [vmem:[%s476] ss:$8 sm:$0x3]
        %v1243 = vlaneseq
        %v1244 = vshrl.u32 %v1243, 7
        %v1245 = vsub.s32 0, %v1244
        %v1246 = vrot.slane %v1241, %v1245
        %v1247 = vlaneseq
        %v1248 = vshrl.u32 %v1247, 7
        %v1249 = vsub.s32 1, %v1248
        %v1250 = vrot.slane %v1241, %v1249
        %v1253 = vmul.f32 %v1237, %v1246
        %v1254 = vmul.f32 %v1233, %v1250
        %v1255 = vmul.f32 %v1238, %v1246
        %v1256 = vmul.f32 %v1234, %v1250
        %v1257 = vmul.f32 %v1239, %v1246
        %v1258 = vmul.f32 %v1235, %v1250
        %v1259 = vmul.f32 %v1240, %v1246
        %v1260 = vmul.f32 %v1236, %v1250
        %1261 = vst [vmem:[#allocation2 + $0x40] sm:$0xff] %v1253
        %1262 = vst [vmem:[#allocation2 + $0x48] sm:$0xff] %v1254
        %1263 = vst [vmem:[#allocation2 + $0x50] sm:$0xff] %v1255
        %1264 = vst [vmem:[#allocation2 + $0x58] sm:$0xff] %v1256
        %1265 = vst [vmem:[#allocation2 + $0x60] sm:$0xff] %v1257
        %1266 = vst [vmem:[#allocation2 + $0x68] sm:$0xff] %v1258
        %1267 = vst [vmem:[#allocation2 + $0x70] sm:$0xff] %v1259
        %1268 = vst [vmem:[#allocation2 + $0x78] sm:$0xff] %v1260
        %1269 = vrot.lane.b32.xlu0 %v1157, 15
        %v1270 = vpop.permute.xlu0 %1269
        %1271 = vrot.lane.b32.xlu0 %v1159, 15
        %v1272 = vpop.permute.xlu0 %1271
        %1273 = vrot.lane.b32.xlu0 %v1161, 15
        %v1274 = vpop.permute.xlu0 %1273
        %1275 = vrot.lane.b32.xlu0 %v1163, 15
        %v1276 = vpop.permute.xlu0 %1275
        %1277 = vrot.lane.b32.xlu0 %v1158, 15
        %v1278 = vpop.permute.xlu0 %1277
        %1279 = vrot.lane.b32.xlu0 %v1160, 15
        %v1280 = vpop.permute.xlu0 %1279
        %1281 = vrot.lane.b32.xlu0 %v1162, 15
        %v1282 = vpop.permute.xlu0 %1281
        %1283 = vrot.lane.b32.xlu0 %v1164, 15
        %v1284 = vpop.permute.xlu0 %1283
        %v1285 = vsel %vm521, %v1270, %v1278
        %v1286 = vsel %vm521, %v1272, %v1280
        %v1287 = vsel %vm521, %v1274, %v1282
        %v1288 = vsel %vm521, %v1276, %v1284
        %v1289 = vsel %vm521, %v1278, %v1270
        %v1290 = vsel %vm521, %v1280, %v1272
        %v1291 = vsel %vm521, %v1282, %v1274
        %v1292 = vsel %vm521, %v1284, %v1276
        %v1293 = vld [vmem:[%s530] ss:$8 sm:$0x3]
        %v1295 = vlaneseq
        %v1296 = vshrl.u32 %v1295, 7
        %v1297 = vsub.s32 0, %v1296
        %v1298 = vrot.slane %v1293, %v1297
        %v1299 = vlaneseq
        %v1300 = vshrl.u32 %v1299, 7
        %v1301 = vsub.s32 1, %v1300
        %v1302 = vrot.slane %v1293, %v1301
        %v1305 = vmul.f32 %v1289, %v1298
        %v1306 = vmul.f32 %v1285, %v1302
        %v1307 = vmul.f32 %v1290, %v1298
        %v1308 = vmul.f32 %v1286, %v1302
        %v1309 = vmul.f32 %v1291, %v1298
        %v1310 = vmul.f32 %v1287, %v1302
        %v1311 = vmul.f32 %v1292, %v1298
        %v1312 = vmul.f32 %v1288, %v1302
        %1313 = vst [vmem:[#allocation2 + $0x80] sm:$0xff] %v1305
        %1314 = vst [vmem:[#allocation2 + $0x88] sm:$0xff] %v1306
        %1315 = vst [vmem:[#allocation2 + $0x90] sm:$0xff] %v1307
        %1316 = vst [vmem:[#allocation2 + $0x98] sm:$0xff] %v1308
        %1317 = vst [vmem:[#allocation2 + $0xa0] sm:$0xff] %v1309
        %1318 = vst [vmem:[#allocation2 + $0xa8] sm:$0xff] %v1310
        %1319 = vst [vmem:[#allocation2 + $0xb0] sm:$0xff] %v1311
        %1320 = vst [vmem:[#allocation2 + $0xb8] sm:$0xff] %v1312
        %1321 = vrot.lane.b32.xlu0 %v1157, 1
        %v1322 = vpop.permute.xlu0 %1321
        %1323 = vrot.lane.b32.xlu0 %v1159, 1
        %v1324 = vpop.permute.xlu0 %1323
        %1325 = vrot.lane.b32.xlu0 %v1161, 1
        %v1326 = vpop.permute.xlu0 %1325
        %1327 = vrot.lane.b32.xlu0 %v1163, 1
        %v1328 = vpop.permute.xlu0 %1327
        %1329 = vrot.lane.b32.xlu0 %v1158, 1
        %v1330 = vpop.permute.xlu0 %1329
        %1331 = vrot.lane.b32.xlu0 %v1160, 1
        %v1332 = vpop.permute.xlu0 %1331
        %1333 = vrot.lane.b32.xlu0 %v1162, 1
        %v1334 = vpop.permute.xlu0 %1333
        %1335 = vrot.lane.b32.xlu0 %v1164, 1
        %v1336 = vpop.permute.xlu0 %1335
        %v1337 = vsel %vm575, %v1322, %v1330
        %v1338 = vsel %vm575, %v1324, %v1332
        %v1339 = vsel %vm575, %v1326, %v1334
        %v1340 = vsel %vm575, %v1328, %v1336
        %v1341 = vsel %vm575, %v1330, %v1322
        %v1342 = vsel %vm575, %v1332, %v1324
        %v1343 = vsel %vm575, %v1334, %v1326
        %v1344 = vsel %vm575, %v1336, %v1328
        %v1345 = vld [vmem:[%s584] ss:$8 sm:$0x3]
        %v1347 = vlaneseq
        %v1348 = vshrl.u32 %v1347, 7
        %v1349 = vsub.s32 0, %v1348
        %v1350 = vrot.slane %v1345, %v1349
        %v1351 = vlaneseq
        %v1352 = vshrl.u32 %v1351, 7
        %v1353 = vsub.s32 1, %v1352
        %v1354 = vrot.slane %v1345, %v1353
        %v1357 = vmul.f32 %v1341, %v1350
        %v1358 = vmul.f32 %v1337, %v1354
        %v1359 = vmul.f32 %v1342, %v1350
        %v1360 = vmul.f32 %v1338, %v1354
        %v1361 = vmul.f32 %v1343, %v1350
        %v1362 = vmul.f32 %v1339, %v1354
        %v1363 = vmul.f32 %v1344, %v1350
        %v1364 = vmul.f32 %v1340, %v1354
        %1365 = vst [vmem:[#allocation2 + $0xc0] sm:$0xff] %v1357
        %1366 = vst [vmem:[#allocation2 + $0xc8] sm:$0xff] %v1358
        %1367 = vst [vmem:[#allocation2 + $0xd0] sm:$0xff] %v1359
        %1368 = vst [vmem:[#allocation2 + $0xd8] sm:$0xff] %v1360
        %1369 = vst [vmem:[#allocation2 + $0xe0] sm:$0xff] %v1361
        %1370 = vst [vmem:[#allocation2 + $0xe8] sm:$0xff] %v1362
        %1371 = vst [vmem:[#allocation2 + $0xf0] sm:$0xff] %v1363
        %1372 = vst [vmem:[#allocation2 + $0xf8] sm:$0xff] %v1364
        %v1373 = vld [vmem:[%s613] ss:$8 sm:$0x3]
        %v1375 = vlaneseq
        %v1376 = vshrl.u32 %v1375, 7
        %v1377 = vsub.s32 0, %v1376
        %v1378 = vrot.slane %v1373, %v1377
        %v1379 = vlaneseq
        %v1380 = vshrl.u32 %v1379, 7
        %v1381 = vsub.s32 1, %v1380
        %v1382 = vrot.slane %v1373, %v1381
        %v1385 = vmul.f32 %v1157, %v1378
        %v1386 = vmul.f32 %v1158, %v1382
        %v1387 = vmul.f32 %v1159, %v1378
        %v1388 = vmul.f32 %v1160, %v1382
        %v1389 = vmul.f32 %v1161, %v1378
        %v1390 = vmul.f32 %v1162, %v1382
        %v1391 = vmul.f32 %v1163, %v1378
        %v1392 = vmul.f32 %v1164, %v1382
        %1393 = vst [vmem:[#allocation2 + $0x100] sm:$0xff] %v1385
        %1394 = vst [vmem:[#allocation2 + $0x108] sm:$0xff] %v1386
        %1395 = vst [vmem:[#allocation2 + $0x110] sm:$0xff] %v1387
        %1396 = vst [vmem:[#allocation2 + $0x118] sm:$0xff] %v1388
        %1397 = vst [vmem:[#allocation2 + $0x120] sm:$0xff] %v1389
        %1398 = vst [vmem:[#allocation2 + $0x128] sm:$0xff] %v1390
        %1399 = vst [vmem:[#allocation2 + $0x130] sm:$0xff] %v1391
        %1400 = vst [vmem:[#allocation2 + $0x138] sm:$0xff] %v1392
        %1401 = vrot.lane.b32.xlu0 %v1157, 127
        %v1402 = vpop.permute.xlu0 %1401
        %1403 = vrot.lane.b32.xlu0 %v1159, 127
        %v1404 = vpop.permute.xlu0 %1403
        %1405 = vrot.lane.b32.xlu0 %v1161, 127
        %v1406 = vpop.permute.xlu0 %1405
        %1407 = vrot.lane.b32.xlu0 %v1163, 127
        %v1408 = vpop.permute.xlu0 %1407
        %1409 = vrot.lane.b32.xlu0 %v1158, 127
        %v1410 = vpop.permute.xlu0 %1409
        %1411 = vrot.lane.b32.xlu0 %v1160, 127
        %v1412 = vpop.permute.xlu0 %1411
        %1413 = vrot.lane.b32.xlu0 %v1162, 127
        %v1414 = vpop.permute.xlu0 %1413
        %1415 = vrot.lane.b32.xlu0 %v1164, 127
        %v1416 = vpop.permute.xlu0 %1415
        %v1417 = vsel %vm658, %v1402, %v1410
        %v1418 = vsel %vm658, %v1404, %v1412
        %v1419 = vsel %vm658, %v1406, %v1414
        %v1420 = vsel %vm658, %v1408, %v1416
        %v1421 = vsel %vm658, %v1410, %v1402
        %v1422 = vsel %vm658, %v1412, %v1404
        %v1423 = vsel %vm658, %v1414, %v1406
        %v1424 = vsel %vm658, %v1416, %v1408
        %v1425 = vld [vmem:[%s667] ss:$8 sm:$0x3]
        %v1427 = vlaneseq
        %v1428 = vshrl.u32 %v1427, 7
        %v1429 = vsub.s32 0, %v1428
        %v1430 = vrot.slane %v1425, %v1429
        %v1431 = vlaneseq
        %v1432 = vshrl.u32 %v1431, 7
        %v1433 = vsub.s32 1, %v1432
        %v1434 = vrot.slane %v1425, %v1433
        %v1437 = vmul.f32 %v1417, %v1430
        %v1438 = vmul.f32 %v1421, %v1434
        %v1439 = vmul.f32 %v1418, %v1430
        %v1440 = vmul.f32 %v1422, %v1434
        %v1441 = vmul.f32 %v1419, %v1430
        %v1442 = vmul.f32 %v1423, %v1434
        %v1443 = vmul.f32 %v1420, %v1430
        %v1444 = vmul.f32 %v1424, %v1434
        %1445 = vst [vmem:[#allocation2 + $0x140] sm:$0xff] %v1437
        %1446 = vst [vmem:[#allocation2 + $0x148] sm:$0xff] %v1438
        %1447 = vst [vmem:[#allocation2 + $0x150] sm:$0xff] %v1439
        %1448 = vst [vmem:[#allocation2 + $0x158] sm:$0xff] %v1440
        %1449 = vst [vmem:[#allocation2 + $0x160] sm:$0xff] %v1441
        %1450 = vst [vmem:[#allocation2 + $0x168] sm:$0xff] %v1442
        %1451 = vst [vmem:[#allocation2 + $0x170] sm:$0xff] %v1443
        %1452 = vst [vmem:[#allocation2 + $0x178] sm:$0xff] %v1444
        %1453 = vrot.lane.b32.xlu0 %v1157, 113
        %v1454 = vpop.permute.xlu0 %1453
        %1455 = vrot.lane.b32.xlu0 %v1159, 113
        %v1456 = vpop.permute.xlu0 %1455
        %1457 = vrot.lane.b32.xlu0 %v1161, 113
        %v1458 = vpop.permute.xlu0 %1457
        %1459 = vrot.lane.b32.xlu0 %v1163, 113
        %v1460 = vpop.permute.xlu0 %1459
        %1461 = vrot.lane.b32.xlu0 %v1158, 113
        %v1462 = vpop.permute.xlu0 %1461
        %1463 = vrot.lane.b32.xlu0 %v1160, 113
        %v1464 = vpop.permute.xlu0 %1463
        %1465 = vrot.lane.b32.xlu0 %v1162, 113
        %v1466 = vpop.permute.xlu0 %1465
        %1467 = vrot.lane.b32.xlu0 %v1164, 113
        %v1468 = vpop.permute.xlu0 %1467
        %v1469 = vsel %vm712, %v1454, %v1462
        %v1470 = vsel %vm712, %v1456, %v1464
        %v1471 = vsel %vm712, %v1458, %v1466
        %v1472 = vsel %vm712, %v1460, %v1468
        %v1473 = vsel %vm712, %v1462, %v1454
        %v1474 = vsel %vm712, %v1464, %v1456
        %v1475 = vsel %vm712, %v1466, %v1458
        %v1476 = vsel %vm712, %v1468, %v1460
        %v1477 = vld [vmem:[%s721] ss:$8 sm:$0x3]
        %v1479 = vlaneseq
        %v1480 = vshrl.u32 %v1479, 7
        %v1481 = vsub.s32 0, %v1480
        %v1482 = vrot.slane %v1477, %v1481
        %v1483 = vlaneseq
        %v1484 = vshrl.u32 %v1483, 7
        %v1485 = vsub.s32 1, %v1484
        %v1486 = vrot.slane %v1477, %v1485
        %v1489 = vmul.f32 %v1469, %v1482
        %v1490 = vmul.f32 %v1473, %v1486
        %v1491 = vmul.f32 %v1470, %v1482
        %v1492 = vmul.f32 %v1474, %v1486
        %v1493 = vmul.f32 %v1471, %v1482
        %v1494 = vmul.f32 %v1475, %v1486
        %v1495 = vmul.f32 %v1472, %v1482
        %v1496 = vmul.f32 %v1476, %v1486
        %1497 = vst [vmem:[#allocation2 + $0x180] sm:$0xff] %v1489
        %1498 = vst [vmem:[#allocation2 + $0x188] sm:$0xff] %v1490
        %1499 = vst [vmem:[#allocation2 + $0x190] sm:$0xff] %v1491
        %1500 = vst [vmem:[#allocation2 + $0x198] sm:$0xff] %v1492
        %1501 = vst [vmem:[#allocation2 + $0x1a0] sm:$0xff] %v1493
        %1502 = vst [vmem:[#allocation2 + $0x1a8] sm:$0xff] %v1494
        %1503 = vst [vmem:[#allocation2 + $0x1b0] sm:$0xff] %v1495
        %1504 = vst [vmem:[#allocation2 + $0x1b8] sm:$0xff] %v1496
        %1505 = vrot.lane.b32.xlu0 %v1157, 112
        %v1506 = vpop.permute.xlu0 %1505
        %1507 = vrot.lane.b32.xlu0 %v1159, 112
        %v1508 = vpop.permute.xlu0 %1507
        %1509 = vrot.lane.b32.xlu0 %v1161, 112
        %v1510 = vpop.permute.xlu0 %1509
        %1511 = vrot.lane.b32.xlu0 %v1163, 112
        %v1512 = vpop.permute.xlu0 %1511
        %1513 = vrot.lane.b32.xlu0 %v1158, 112
        %v1514 = vpop.permute.xlu0 %1513
        %1515 = vrot.lane.b32.xlu0 %v1160, 112
        %v1516 = vpop.permute.xlu0 %1515
        %1517 = vrot.lane.b32.xlu0 %v1162, 112
        %v1518 = vpop.permute.xlu0 %1517
        %1519 = vrot.lane.b32.xlu0 %v1164, 112
        %v1520 = vpop.permute.xlu0 %1519
        %v1521 = vsel %vm766, %v1506, %v1514
        %v1522 = vsel %vm766, %v1508, %v1516
        %v1523 = vsel %vm766, %v1510, %v1518
        %v1524 = vsel %vm766, %v1512, %v1520
        %v1525 = vsel %vm766, %v1514, %v1506
        %v1526 = vsel %vm766, %v1516, %v1508
        %v1527 = vsel %vm766, %v1518, %v1510
        %v1528 = vsel %vm766, %v1520, %v1512
        %v1529 = vld [vmem:[%s775] ss:$8 sm:$0x3]
        %v1531 = vlaneseq
        %v1532 = vshrl.u32 %v1531, 7
        %v1533 = vsub.s32 0, %v1532
        %v1534 = vrot.slane %v1529, %v1533
        %v1535 = vlaneseq
        %v1536 = vshrl.u32 %v1535, 7
        %v1537 = vsub.s32 1, %v1536
        %v1538 = vrot.slane %v1529, %v1537
        %v1541 = vmul.f32 %v1521, %v1534
        %v1542 = vmul.f32 %v1525, %v1538
        %v1543 = vmul.f32 %v1522, %v1534
        %v1544 = vmul.f32 %v1526, %v1538
        %v1545 = vmul.f32 %v1523, %v1534
        %v1546 = vmul.f32 %v1527, %v1538
        %v1547 = vmul.f32 %v1524, %v1534
        %v1548 = vmul.f32 %v1528, %v1538
        %1549 = vst [vmem:[#allocation2 + $0x1c0] sm:$0xff] %v1541
        %1550 = vst [vmem:[#allocation2 + $0x1c8] sm:$0xff] %v1542
        %1551 = vst [vmem:[#allocation2 + $0x1d0] sm:$0xff] %v1543
        %1552 = vst [vmem:[#allocation2 + $0x1d8] sm:$0xff] %v1544
        %1553 = vst [vmem:[#allocation2 + $0x1e0] sm:$0xff] %v1545
        %1554 = vst [vmem:[#allocation2 + $0x1e8] sm:$0xff] %v1546
        %1555 = vst [vmem:[#allocation2 + $0x1f0] sm:$0xff] %v1547
        %1556 = vst [vmem:[#allocation2 + $0x1f8] sm:$0xff] %v1548
        %1557 = vrot.lane.b32.xlu0 %v1157, 111
        %v1558 = vpop.permute.xlu0 %1557
        %1559 = vrot.lane.b32.xlu0 %v1159, 111
        %v1560 = vpop.permute.xlu0 %1559
        %1561 = vrot.lane.b32.xlu0 %v1161, 111
        %v1562 = vpop.permute.xlu0 %1561
        %1563 = vrot.lane.b32.xlu0 %v1163, 111
        %v1564 = vpop.permute.xlu0 %1563
        %1565 = vrot.lane.b32.xlu0 %v1158, 111
        %v1566 = vpop.permute.xlu0 %1565
        %1567 = vrot.lane.b32.xlu0 %v1160, 111
        %v1568 = vpop.permute.xlu0 %1567
        %1569 = vrot.lane.b32.xlu0 %v1162, 111
        %v1570 = vpop.permute.xlu0 %1569
        %1571 = vrot.lane.b32.xlu0 %v1164, 111
        %v1572 = vpop.permute.xlu0 %1571
        %v1573 = vsel %vm820, %v1558, %v1566
        %v1574 = vsel %vm820, %v1560, %v1568
        %v1575 = vsel %vm820, %v1562, %v1570
        %v1576 = vsel %vm820, %v1564, %v1572
        %v1577 = vsel %vm820, %v1566, %v1558
        %v1578 = vsel %vm820, %v1568, %v1560
        %v1579 = vsel %vm820, %v1570, %v1562
        %v1580 = vsel %vm820, %v1572, %v1564
        %v1581 = vld [vmem:[%s829] ss:$8 sm:$0x3]
        %v1583 = vlaneseq
        %v1584 = vshrl.u32 %v1583, 7
        %v1585 = vsub.s32 0, %v1584
        %v1586 = vrot.slane %v1581, %v1585
        %v1587 = vlaneseq
        %v1588 = vshrl.u32 %v1587, 7
        %v1589 = vsub.s32 1, %v1588
        %v1590 = vrot.slane %v1581, %v1589
        %v1593 = vmul.f32 %v1573, %v1586
        %v1594 = vmul.f32 %v1577, %v1590
        %v1595 = vmul.f32 %v1574, %v1586
        %v1596 = vmul.f32 %v1578, %v1590
        %v1597 = vmul.f32 %v1575, %v1586
        %v1598 = vmul.f32 %v1579, %v1590
        %v1599 = vmul.f32 %v1576, %v1586
        %v1600 = vmul.f32 %v1580, %v1590
        %1601 = vst [vmem:[#allocation2 + $0x200] sm:$0xff] %v1593
        %1602 = vst [vmem:[#allocation2 + $0x208] sm:$0xff] %v1594
        %1603 = vst [vmem:[#allocation2 + $0x210] sm:$0xff] %v1595
        %1604 = vst [vmem:[#allocation2 + $0x218] sm:$0xff] %v1596
        %1605 = vst [vmem:[#allocation2 + $0x220] sm:$0xff] %v1597
        %1606 = vst [vmem:[#allocation2 + $0x228] sm:$0xff] %v1598
        %1607 = vst [vmem:[#allocation2 + $0x230] sm:$0xff] %v1599
        %1608 = vst [vmem:[#allocation2 + $0x238] sm:$0xff] %v1600
        %v1609 = vld [vmem:[#allocation6] sm:$0xff]
        %v1610 = vld [vmem:[#allocation6 + $0x8] sm:$0xff]
        %v1611 = vld [vmem:[#allocation6 + $0x10] sm:$0xff]
        %v1612 = vld [vmem:[#allocation6 + $0x18] sm:$0xff]
        %v1613 = vld [vmem:[#allocation6 + $0x20] sm:$0xff]
        %v1614 = vld [vmem:[#allocation6 + $0x28] sm:$0xff]
        %v1615 = vld [vmem:[#allocation6 + $0x30] sm:$0xff]
        %v1616 = vld [vmem:[#allocation6 + $0x38] sm:$0xff]
        %v1617 = vld [vmem:[#allocation6 + $0x40] sm:$0xff]
        %v1618 = vld [vmem:[#allocation6 + $0x48] sm:$0xff]
        %v1619 = vld [vmem:[#allocation6 + $0x50] sm:$0xff]
        %v1620 = vld [vmem:[#allocation6 + $0x58] sm:$0xff]
        %v1621 = vld [vmem:[#allocation2] sm:$0xff]
        %v1622 = vld [vmem:[#allocation2 + $0x8] sm:$0xff]
        %v1623 = vld [vmem:[#allocation2 + $0x10] sm:$0xff]
        %v1624 = vld [vmem:[#allocation2 + $0x18] sm:$0xff]
        %v1625 = vld [vmem:[#allocation2 + $0x20] sm:$0xff]
        %v1626 = vld [vmem:[#allocation2 + $0x28] sm:$0xff]
        %v1627 = vld [vmem:[#allocation2 + $0x30] sm:$0xff]
        %v1628 = vld [vmem:[#allocation2 + $0x38] sm:$0xff]
        %v1629 = vld [vmem:[#allocation2 + $0x40] sm:$0xff]
        %v1630 = vld [vmem:[#allocation2 + $0x48] sm:$0xff]
        %v1631 = vld [vmem:[#allocation2 + $0x50] sm:$0xff]
        %v1632 = vld [vmem:[#allocation2 + $0x58] sm:$0xff]
        %v1633 = vld [vmem:[#allocation2 + $0x60] sm:$0xff]
        %v1634 = vld [vmem:[#allocation2 + $0x68] sm:$0xff]
        %v1635 = vld [vmem:[#allocation2 + $0x70] sm:$0xff]
        %v1636 = vld [vmem:[#allocation2 + $0x78] sm:$0xff]
        %v1637 = vld [vmem:[#allocation2 + $0x80] sm:$0xff]
        %v1638 = vld [vmem:[#allocation2 + $0x88] sm:$0xff]
        %v1639 = vld [vmem:[#allocation2 + $0x90] sm:$0xff]
        %v1640 = vld [vmem:[#allocation2 + $0x98] sm:$0xff]
        %v1641 = vld [vmem:[#allocation2 + $0xa0] sm:$0xff]
        %v1642 = vld [vmem:[#allocation2 + $0xa8] sm:$0xff]
        %v1643 = vld [vmem:[#allocation2 + $0xb0] sm:$0xff]
        %v1644 = vld [vmem:[#allocation2 + $0xb8] sm:$0xff]
        %v1645 = vld [vmem:[#allocation2 + $0xc0] sm:$0xff]
        %v1646 = vld [vmem:[#allocation2 + $0xc8] sm:$0xff]
        %v1647 = vld [vmem:[#allocation2 + $0xd0] sm:$0xff]
        %v1648 = vld [vmem:[#allocation2 + $0xd8] sm:$0xff]
        %v1649 = vld [vmem:[#allocation2 + $0xe0] sm:$0xff]
        %v1650 = vld [vmem:[#allocation2 + $0xe8] sm:$0xff]
        %v1651 = vld [vmem:[#allocation2 + $0xf0] sm:$0xff]
        %v1652 = vld [vmem:[#allocation2 + $0xf8] sm:$0xff]
        %v1653 = vld [vmem:[#allocation2 + $0x100] sm:$0xff]
        %v1654 = vld [vmem:[#allocation2 + $0x108] sm:$0xff]
        %v1655 = vld [vmem:[#allocation2 + $0x110] sm:$0xff]
        %v1656 = vld [vmem:[#allocation2 + $0x118] sm:$0xff]
        %v1657 = vld [vmem:[#allocation2 + $0x120] sm:$0xff]
        %v1658 = vld [vmem:[#allocation2 + $0x128] sm:$0xff]
        %v1659 = vld [vmem:[#allocation2 + $0x130] sm:$0xff]
        %v1660 = vld [vmem:[#allocation2 + $0x138] sm:$0xff]
        %v1661 = vld [vmem:[#allocation2 + $0x140] sm:$0xff]
        %v1662 = vld [vmem:[#allocation2 + $0x148] sm:$0xff]
        %v1663 = vld [vmem:[#allocation2 + $0x150] sm:$0xff]
        %v1664 = vld [vmem:[#allocation2 + $0x158] sm:$0xff]
        %v1665 = vld [vmem:[#allocation2 + $0x160] sm:$0xff]
        %v1666 = vld [vmem:[#allocation2 + $0x168] sm:$0xff]
        %v1667 = vld [vmem:[#allocation2 + $0x170] sm:$0xff]
        %v1668 = vld [vmem:[#allocation2 + $0x178] sm:$0xff]
        %v1669 = vld [vmem:[#allocation2 + $0x180] sm:$0xff]
        %v1670 = vld [vmem:[#allocation2 + $0x188] sm:$0xff]
        %v1671 = vld [vmem:[#allocation2 + $0x190] sm:$0xff]
        %v1672 = vld [vmem:[#allocation2 + $0x198] sm:$0xff]
        %v1673 = vld [vmem:[#allocation2 + $0x1a0] sm:$0xff]
        %v1674 = vld [vmem:[#allocation2 + $0x1a8] sm:$0xff]
        %v1675 = vld [vmem:[#allocation2 + $0x1b0] sm:$0xff]
        %v1676 = vld [vmem:[#allocation2 + $0x1b8] sm:$0xff]
        %v1677 = vld [vmem:[#allocation2 + $0x1c0] sm:$0xff]
        %v1678 = vld [vmem:[#allocation2 + $0x1c8] sm:$0xff]
        %v1679 = vld [vmem:[#allocation2 + $0x1d0] sm:$0xff]
        %v1680 = vld [vmem:[#allocation2 + $0x1d8] sm:$0xff]
        %v1681 = vld [vmem:[#allocation2 + $0x1e0] sm:$0xff]
        %v1682 = vld [vmem:[#allocation2 + $0x1e8] sm:$0xff]
        %v1683 = vld [vmem:[#allocation2 + $0x1f0] sm:$0xff]
        %v1684 = vld [vmem:[#allocation2 + $0x1f8] sm:$0xff]
        %v1685 = vld [vmem:[#allocation2 + $0x200] sm:$0xff]
        %v1686 = vld [vmem:[#allocation2 + $0x208] sm:$0xff]
        %v1687 = vld [vmem:[#allocation2 + $0x210] sm:$0xff]
        %v1688 = vld [vmem:[#allocation2 + $0x218] sm:$0xff]
        %v1689 = vld [vmem:[#allocation2 + $0x220] sm:$0xff]
        %v1690 = vld [vmem:[#allocation2 + $0x228] sm:$0xff]
        %v1691 = vld [vmem:[#allocation2 + $0x230] sm:$0xff]
        %v1692 = vld [vmem:[#allocation2 + $0x238] sm:$0xff]
        %v1693 = vld [vmem:[%s5] sm:$0xff]
        %v1694 = vld [vmem:[%s5 + $0x8] sm:$0xff]
        %v1695 = vld [vmem:[%s5 + $0x10] sm:$0xff]
        %v1696 = vld [vmem:[%s5 + $0x18] sm:$0xff]
        %1698 = vset.pattern.permute.xlu0 0
        %1699 = vperm.xlu0 %1698, %v1693
        %v1700 = vpop.permute.xlu0 %1699
        %1703 = vset.pattern.permute.xlu0 0
        %1704 = vperm.xlu0 %1703, %v1694
        %v1705 = vpop.permute.xlu0 %1704
        %1708 = vset.pattern.permute.xlu0 0
        %1709 = vperm.xlu0 %1708, %v1695
        %v1710 = vpop.permute.xlu0 %1709
        %1713 = vset.pattern.permute.xlu0 0
        %1714 = vperm.xlu0 %1713, %v1696
        %v1715 = vpop.permute.xlu0 %1714
        %v1718 = vsel %vm966, %v1611, 0
        %v1721 = vsel %vm966, %v1614, 0
        %v1724 = vsel %vm966, %v1617, 0
        %v1727 = vsel %vm966, %v1620, 0
        %1729 = vmatprep.subr.mxu0 %v1622
        %1730 = vmatpush1.msra.mxu0 %v1621
        %1731 = vmatprep.subr.mxu0 %v1624
        %1732 = vmatpush1.msra.mxu0 %v1623
        %1733 = vmatprep.subr.mxu0 %v1626
        %1734 = vmatpush1.msra.mxu0 %v1625
        %1735 = vmatprep.subr.mxu0 %v1628
        %1736 = vmatpush1.msra.mxu0 %v1627
        %1737 = vmatprep.subr.mxu0 %v1630
        %1738 = vmatpush1.msra.mxu0 %v1629
        %1739 = vmatprep.subr.mxu0 %v1632
        %1740 = vmatpush1.msra.mxu0 %v1631
        %1741 = vmatprep.subr.mxu0 %v1634
        %1742 = vmatpush1.msra.mxu0 %v1633
        %1743 = vmatprep.subr.mxu0 %v1636
        %1744 = vmatpush1.msra.mxu0 %v1635
        %1745 = vmatprep.subr.mxu0 %v1638
        %1746 = vmatpush1.msra.mxu0 %v1637
        %1747 = vmatprep.subr.mxu0 %v1640
        %1748 = vmatpush1.msra.mxu0 %v1639
        %1749 = vmatprep.subr.mxu0 %v1642
        %1750 = vmatpush1.msra.mxu0 %v1641
        %1751 = vmatprep.subr.mxu0 %v1644
        %1752 = vmatpush1.msra.mxu0 %v1643
        %1753 = vmatprep.subr.mxu0 %v1646
        %1754 = vmatpush1.msra.mxu0 %v1645
        %1755 = vmatprep.subr.mxu0 %v1648
        %1756 = vmatpush1.msra.mxu0 %v1647
        %1757 = vmatprep.subr.mxu0 %v1650
        %1758 = vmatpush1.msra.mxu0 %v1649
        %1759 = vmatprep.subr.mxu0 %v1652
        %1760 = vmatpush1.msra.mxu0 %v1651
        %1761 = vmatprep.subr.mxu0 %v1654
        %1762 = vmatpush1.msra.mxu0 %v1653
        %1763 = vmatprep.subr.mxu0 %v1656
        %1764 = vmatpush1.msra.mxu0 %v1655
        %1765 = vmatprep.subr.mxu0 %v1658
        %1766 = vmatpush1.msra.mxu0 %v1657
        %1767 = vmatprep.subr.mxu0 %v1660
        %1768 = vmatpush1.msra.mxu0 %v1659
        %1769 = vmatprep.subr.mxu0 %v1662
        %1770 = vmatpush1.msra.mxu0 %v1661
        %1771 = vmatprep.subr.mxu0 %v1664
        %1772 = vmatpush1.msra.mxu0 %v1663
        %1773 = vmatprep.subr.mxu0 %v1666
        %1774 = vmatpush1.msra.mxu0 %v1665
        %1775 = vmatprep.subr.mxu0 %v1668
        %1776 = vmatpush1.msra.mxu0 %v1667
        %1777 = vmatprep.subr.mxu0 %v1670
        %1778 = vmatpush1.msra.mxu0 %v1669
        %1779 = vmatprep.subr.mxu0 %v1672
        %1780 = vmatpush1.msra.mxu0 %v1671
        %1781 = vmatprep.subr.mxu0 %v1674
        %1782 = vmatpush1.msra.mxu0 %v1673
        %1783 = vmatprep.subr.mxu0 %v1676
        %1784 = vmatpush1.msra.mxu0 %v1675
        %1785 = vmatprep.subr.mxu0 %v1678
        %1786 = vmatpush1.msra.mxu0 %v1677
        %1787 = vmatprep.subr.mxu0 %v1680
        %1788 = vmatpush1.msra.mxu0 %v1679
        %1789 = vmatprep.subr.mxu0 %v1682
        %1790 = vmatpush1.msra.mxu0 %v1681
        %1791 = vmatprep.subr.mxu0 %v1684
        %1792 = vmatpush1.msra.mxu0 %v1683
        %1793 = vmatprep.mubr.f32.mxu0 %v1610
        %1794 = vmatmul.mubr.f32.gmra.mrb[0].mxu0 %v1609
        %v1795 = vpop.f32.mrb[0].mxu0
        %v1796 = vadd.f32 %v1700, %v1795
        %v1797 = vpop.f32.mrb[0].mxu0
        %v1798 = vadd.f32 %v1700, %v1797
        %1799 = vmatprep.mubr.f32.mxu0 %v1613
        %1800 = vmatmul.mubr.f32.gmra.mrb[0].mxu0 %v1612
        %v1801 = vpop.f32.mrb[0].mxu0
        %v1802 = vadd.f32 %v1705, %v1801
        %v1803 = vpop.f32.mrb[0].mxu0
        %v1804 = vadd.f32 %v1705, %v1803
        %1805 = vmatprep.mubr.f32.mxu0 %v1616
        %1806 = vmatmul.mubr.f32.gmra.mrb[0].mxu0 %v1615
        %v1807 = vpop.f32.mrb[0].mxu0
        %v1808 = vadd.f32 %v1710, %v1807
        %v1809 = vpop.f32.mrb[0].mxu0
        %v1810 = vadd.f32 %v1710, %v1809
        %1811 = vmatprep.mubr.f32.mxu0 %v1619
        %1812 = vmatmul.mubr.f32.gmra.mrb[0].mxu0 %v1618
        %v1813 = vpop.f32.mrb[0].mxu0
        %v1814 = vadd.f32 %v1715, %v1813
        %v1815 = vpop.f32.mrb[0].mxu0
        %v1816 = vadd.f32 %v1715, %v1815
        %1817 = vdwg.mxu0
        %1818 = vmatprep.subr.mxu0 %v1686
        %1819 = vmatpush1.msra.mxu0 %v1685
        %1820 = vmatprep.subr.mxu0 %v1688
        %1821 = vmatpush1.msra.mxu0 %v1687
        %1822 = vmatprep.subr.mxu0 %v1690
        %1823 = vmatpush1.msra.mxu0 %v1689
        %1824 = vmatprep.subr.mxu0 %v1692
        %1825 = vmatpush1.msra.mxu0 %v1691
        %1826 = vmatprep.subr.mxu0 0.0
        %1827 = vmatpush1.msra.mxu0 0.0
        %1828 = vmatprep.subr.mxu0 0.0
        %1829 = vmatpush1.msra.mxu0 0.0
        %1830 = vmatprep.subr.mxu0 0.0
        %1831 = vmatpush1.msra.mxu0 0.0
        %1832 = vmatprep.subr.mxu0 0.0
        %1833 = vmatpush1.msra.mxu0 0.0
        %1834 = vmatprep.subr.mxu0 0.0
        %1835 = vmatpush1.msra.mxu0 0.0
        %1836 = vmatprep.subr.mxu0 0.0
        %1837 = vmatpush1.msra.mxu0 0.0
        %1838 = vmatprep.subr.mxu0 0.0
        %1839 = vmatpush1.msra.mxu0 0.0
        %1840 = vmatprep.subr.mxu0 0.0
        %1841 = vmatpush1.msra.mxu0 0.0
        %1842 = vmatprep.subr.mxu0 0.0
        %1843 = vmatpush1.msra.mxu0 0.0
        %1844 = vmatprep.subr.mxu0 0.0
        %1845 = vmatpush1.msra.mxu0 0.0
        %1846 = vmatprep.subr.mxu0 0.0
        %1847 = vmatpush1.msra.mxu0 0.0
        %1848 = vmatprep.subr.mxu0 0.0
        %1849 = vmatpush1.msra.mxu0 0.0
        %1850 = vmatprep.subr.mxu0 0.0
        %1851 = vmatpush1.msra.mxu0 0.0
        %1852 = vmatprep.subr.mxu0 0.0
        %1853 = vmatpush1.msra.mxu0 0.0
        %1854 = vmatprep.subr.mxu0 0.0
        %1855 = vmatpush1.msra.mxu0 0.0
        %1856 = vmatprep.subr.mxu0 0.0
        %1857 = vmatpush1.msra.mxu0 0.0
        %1858 = vmatprep.subr.mxu0 0.0
        %1859 = vmatpush1.msra.mxu0 0.0
        %1860 = vmatprep.subr.mxu0 0.0
        %1861 = vmatpush1.msra.mxu0 0.0
        %1862 = vmatprep.subr.mxu0 0.0
        %1863 = vmatpush1.msra.mxu0 0.0
        %1864 = vmatprep.subr.mxu0 0.0
        %1865 = vmatpush1.msra.mxu0 0.0
        %1866 = vmatprep.subr.mxu0 0.0
        %1867 = vmatpush1.msra.mxu0 0.0
        %1868 = vmatprep.subr.mxu0 0.0
        %1869 = vmatpush1.msra.mxu0 0.0
        %1870 = vmatprep.subr.mxu0 0.0
        %1871 = vmatpush1.msra.mxu0 0.0
        %1872 = vmatprep.subr.mxu0 0.0
        %1873 = vmatpush1.msra.mxu0 0.0
        %1874 = vmatprep.subr.mxu0 0.0
        %1875 = vmatpush1.msra.mxu0 0.0
        %1876 = vmatprep.subr.mxu0 0.0
        %1877 = vmatpush1.msra.mxu0 0.0
        %1878 = vmatprep.subr.mxu0 0.0
        %1879 = vmatpush1.msra.mxu0 0.0
        %1880 = vmatprep.subr.mxu0 0.0
        %1881 = vmatpush1.msra.mxu0 0.0
        %1882 = vmatprep.mubr.f32.mxu0 0.0
        %1883 = vmatmul.mubr.f32.gmra.mrb[0].mxu0 %v1718
        %v1884 = vpop.f32.mrb[0].mxu0
        %v1885 = vadd.f32 %v1796, %v1884
        %v1886 = vpop.f32.mrb[0].mxu0
        %v1887 = vadd.f32 %v1798, %v1886
        %1888 = vmatprep.mubr.f32.mxu0 0.0
        %1889 = vmatmul.mubr.f32.gmra.mrb[0].mxu0 %v1721
        %v1890 = vpop.f32.mrb[0].mxu0
        %v1891 = vadd.f32 %v1802, %v1890
        %v1892 = vpop.f32.mrb[0].mxu0
        %v1893 = vadd.f32 %v1804, %v1892
        %1894 = vmatprep.mubr.f32.mxu0 0.0
        %1895 = vmatmul.mubr.f32.gmra.mrb[0].mxu0 %v1724
        %v1896 = vpop.f32.mrb[0].mxu0
        %v1897 = vadd.f32 %v1808, %v1896
        %v1898 = vpop.f32.mrb[0].mxu0
        %v1899 = vadd.f32 %v1810, %v1898
        %1900 = vmatprep.mubr.f32.mxu0 0.0
        %1901 = vmatmul.mubr.f32.gmra.mrb[0].mxu0 %v1727
        %v1902 = vpop.f32.mrb[0].mxu0
        %v1903 = vadd.f32 %v1814, %v1902
        %v1904 = vpop.f32.mrb[0].mxu0
        %v1905 = vadd.f32 %v1816, %v1904
        %1906 = vdwg.mxu0
        %v1907 = vadd.f32 %v1885, %v1887
        %1908 = vadd.xlane.f32.xlu0 %v1907
        %v1909 = vpop.xlane.xlu0 %1908
        %v1910 = vadd.f32 %v1891, %v1893
        %1911 = vadd.xlane.f32.xlu0 %v1910
        %v1912 = vpop.xlane.xlu0 %1911
        %v1913 = vadd.f32 %v1897, %v1899
        %1914 = vadd.xlane.f32.xlu0 %v1913
        %v1915 = vpop.xlane.xlu0 %1914
        %v1916 = vadd.f32 %v1903, %v1905
        %1917 = vadd.xlane.f32.xlu0 %v1916
        %v1918 = vpop.xlane.xlu0 %1917
        %v1919 = vrcp.pop 256.0
        %v1920 = vmul.f32 %v1909, %v1919
        %v1921 = vmul.f32 %v1912, %v1919
        %v1922 = vmul.f32 %v1915, %v1919
        %v1923 = vmul.f32 %v1918, %v1919
        %v1924 = vld [vmem:[%s6] sm:$0xff]
        %v1925 = vld [vmem:[%s6 + $0x8] sm:$0xff]
        %v1926 = vld [vmem:[%s6 + $0x10] sm:$0xff]
        %v1927 = vld [vmem:[%s6 + $0x18] sm:$0xff]
        %v1928 = vmul.f32 %v1924, %v1920
        %v1929 = vmul.f32 %v1925, %v1921
        %v1930 = vmul.f32 %v1926, %v1922
        %v1931 = vmul.f32 %v1927, %v1923
        %vm1932 = vcmask 15360
        %v1933 = vsel %vm1932, %v1928, 0.0
        %v1934 = vsel %vm1932, %v1929, 0.0
        %v1935 = vadd.f32 %v1933, %v1934
        %v1936 = vsel %vm1932, %v1930, 0.0
        %v1937 = vadd.f32 %v1935, %v1936
        %v1938 = vsel %vm1932, %v1931, 0.0
        %v1939 = vadd.f32 %v1937, %v1938
        %v1940 = vrot.slane %v1939, 4
        %v1941 = vadd.f32 %v1939, %v1940
        %v1942 = vrot.slane %v1941, 2
        %v1943 = vadd.f32 %v1941, %v1942
        %v1944 = vrot.slane %v1943, 1
        %v1945 = vadd.f32 %v1943, %v1944
        %v1946 = vld [vmem:[%s7] sm:$0x1]
        %v1947 = vadd.f32 %v1945, %v1946
        %v1948 = vmax.f32 %v1947, 0.0
        %v1949 = vld [vmem:[%s8] sm:$0xff]
        %v1950 = vld [vmem:[%s8 + $0x8] sm:$0xff]
        %v1951 = vld [vmem:[%s8 + $0x10] sm:$0xff]
        %v1952 = vld [vmem:[%s8 + $0x18] sm:$0xff]
        %v1953 = vlaneseq
        %v1954 = vshrl.u32 %v1953, 7
        %v1955 = vsub.s32 0, %v1954
        %v1956 = vrot.slane %v1948, %v1955
        %v1957 = vmul.f32 %v1949, %v1956
        %v1958 = vmul.f32 %v1950, %v1956
        %v1959 = vmul.f32 %v1951, %v1956
        %v1960 = vmul.f32 %v1952, %v1956
        %v1961 = vsel %vm1932, %v1957, 0.0
        %1962 = vadd.xlane.f32.xlu0 %v1961
        %v1963 = vpop.xlane.xlu0 %1962
        %v1964 = vsel %vm1932, %v1958, 0.0
        %1965 = vadd.xlane.f32.xlu0 %v1964
        %v1966 = vpop.xlane.xlu0 %1965
        %v1967 = vsel %vm1932, %v1959, 0.0
        %1968 = vadd.xlane.f32.xlu0 %v1967
        %v1969 = vpop.xlane.xlu0 %1968
        %v1970 = vsel %vm1932, %v1960, 0.0
        %1971 = vadd.xlane.f32.xlu0 %v1970
        %v1972 = vpop.xlane.xlu0 %1971
        %v1973 = vld [vmem:[%s9] sm:$0xff]
        %v1974 = vld [vmem:[%s9 + $0x8] sm:$0xff]
        %v1975 = vld [vmem:[%s9 + $0x10] sm:$0xff]
        %v1976 = vld [vmem:[%s9 + $0x18] sm:$0xff]
        %v1977 = vadd.f32 %v1963, %v1973
        %v1978 = vadd.f32 %v1966, %v1974
        %v1979 = vadd.f32 %v1969, %v1975
        %v1980 = vadd.f32 %v1972, %v1976
        %v1981 = vxor.u32 %v1977, 2147483648
        %v1982 = vxor.u32 %v1978, 2147483648
        %v1983 = vxor.u32 %v1979, 2147483648
        %v1984 = vxor.u32 %v1980, 2147483648
        %v1985 = vmul.f32 %v1981, 1.442695
        %v1986 = vpow.pop %v1985
        %v1987 = vmul.f32 %v1982, 1.442695
        %v1988 = vpow.pop %v1987
        %v1989 = vmul.f32 %v1983, 1.442695
        %v1990 = vpow.pop %v1989
        %v1991 = vmul.f32 %v1984, 1.442695
        %v1992 = vpow.pop %v1991
        %v1993 = vadd.f32 %v1986, 1.0
        %v1994 = vadd.f32 %v1988, 1.0
        %v1995 = vadd.f32 %v1990, 1.0
        %v1996 = vadd.f32 %v1992, 1.0
        %v1997 = vrcp.pop %v1993
        %v1998 = vmul.f32 1.0, %v1997
        %v1999 = vrcp.pop %v1994
        %v2000 = vmul.f32 1.0, %v1999
        %v2001 = vrcp.pop %v1995
        %v2002 = vmul.f32 1.0, %v2001
        %v2003 = vrcp.pop %v1996
        %v2004 = vmul.f32 1.0, %v2003
        %2006 = vset.pattern.permute.xlu0 0
        %2007 = vperm.xlu0 %2006, %v1998
        %v2008 = vpop.permute.xlu0 %2007
        %2011 = vset.pattern.permute.xlu0 0
        %2012 = vperm.xlu0 %2011, %v2000
        %v2013 = vpop.permute.xlu0 %2012
        %2016 = vset.pattern.permute.xlu0 0
        %2017 = vperm.xlu0 %2016, %v2002
        %v2018 = vpop.permute.xlu0 %2017
        %2021 = vset.pattern.permute.xlu0 0
        %2022 = vperm.xlu0 %2021, %v2004
        %v2023 = vpop.permute.xlu0 %2022
        %v2025 = vmul.f32 %v1885, %v2008
        %v2026 = vmul.f32 %v1887, %v2008
        %v2027 = vmul.f32 %v1891, %v2013
        %v2028 = vmul.f32 %v1893, %v2013
        %v2029 = vmul.f32 %v1897, %v2018
        %v2030 = vmul.f32 %v1899, %v2018
        %v2031 = vmul.f32 %v1903, %v2023
        %v2032 = vmul.f32 %v1905, %v2023
        %v2033 = vadd.f32 %v2025, %v388
        %v2034 = vadd.f32 %v2026, %v389
        %v2035 = vadd.f32 %v2027, %v390
        %v2036 = vadd.f32 %v2028, %v391
        %v2037 = vadd.f32 %v2029, %v392
        %v2038 = vadd.f32 %v2030, %v393
        %v2039 = vadd.f32 %v2031, %v394
        %v2040 = vadd.f32 %v2032, %v395
        %2041 = vst [vmem:[%s382] sm:$0xff] %v2033
        %2042 = vst [vmem:[%s382 + $0x8] sm:$0xff] %v2034
        %2043 = vst [vmem:[%s382 + $0x10] sm:$0xff] %v2035
        %2044 = vst [vmem:[%s382 + $0x18] sm:$0xff] %v2036
        %2045 = vst [vmem:[%s382 + $0x20] sm:$0xff] %v2037
        %2046 = vst [vmem:[%s382 + $0x28] sm:$0xff] %v2038
        %2047 = vst [vmem:[%s382 + $0x30] sm:$0xff] %v2039
        %2048 = vst [vmem:[%s382 + $0x38] sm:$0xff] %v2040
        %s2049 = sand.u32 %s249, 1
        %s2050 = scalar_lea.sflag [#allocation5], %s2049
        %s2051 = sand.u32 %s249, 1
        %s2052 = smul.addr %s2051, 64
        %s2053 = scalar_lea.vmem [#allocation8], %s2052
        // Predicated region
        $region69: #{tpu_custom_call.1} parent=59 // pred_check
          %p2054 = pneg %p259
        $region70: #{tpu_custom_call.1} parent=59 // pred_check_branch
          %2056 = sbr.rel (%p2054) target = $region72
        $region71: #{tpu_custom_call.1} parent=59 // pred_region
          %s2058 = ssub.s32 1024, 1024
          %2059 = vsyncadd %s2050, %s2058
          %s2060 = smul.addr %s26, 8
          %s2061 = smul.addr %s2060, 128
          %s2062 = scalar_lea.hbm %s10, %s2061
          %s2063 = sshll.u32 %s2053, 4
          %s2064 = int_to_ptr.vmem [resolvable:$true] %s2063
          %2069 = dma.vmem_to_hbm [thread:$0]  %s2064, 1024, %s2062, %s2050, 256, 256, 16
        $region72: #{tpu_custom_call.1} parent=59 // pred_fallthru
          _
      $region60: #{tpu_custom_call.1} parent=5 // pred_fallthru
        _
      %p2070 = scmp.le.s32.totalorder 2, %s21
      // Predicated region
      $region73: #{tpu_custom_call.1} parent=5 // pred_check
        %p2071 = pneg %p2070
      $region74: #{tpu_custom_call.1} parent=5 // pred_check_branch
        %2073 = sbr.rel (%p2071) target = $region76
      $region75: #{tpu_custom_call.1} parent=5 // pred_region
        %s2074 = ssub.s32 %s21, 2
        // Predicated region
        $region77: #{tpu_custom_call.1} parent=75 // pred_check
          %p2075 = pneg %p265
        $region78: #{tpu_custom_call.1} parent=75 // pred_check_branch
          %2077 = sbr.rel (%p2075) target = $region80
        $region79: #{tpu_custom_call.1} parent=75 // pred_region
          %s2078 = sand.u32 %s250, 1
          %s2079 = scalar_lea.sflag [#allocation5], %s2078
          %s2080 = sand.u32 %s250, 1
          %s2081 = smul.addr %s2080, 64
          %s2082 = scalar_lea.vmem [#allocation8], %s2081
          %2083 = dma.done %s2079, 1024
        $region80: #{tpu_custom_call.1} parent=75 // pred_fallthru
          _
      $region76: #{tpu_custom_call.1} parent=5 // pred_fallthru
        _
    $region6: #{tpu_custom_call.1} parent=1 // loop_footer
      %s25 = sadd.s32 1, %s21
    $region7: #{tpu_custom_call.1} parent=1 // loop_footer_branch
      %20 = sbr.rel target = $region3
    $region8: #{tpu_custom_call.1} parent=1 // loop_exit
      _
    %2084 = vsyncpa [#allocation4], 1
    %s2085 = scalar_lea.sflag [#allocation4], 1
    %2086 = vsyncpa %s2085, 1
    %2087 = vsyncpa [#allocation7], 1
    %2088 = vsyncpa [#allocation5], 1
    %s2089 = scalar_lea.sflag [#allocation5], 1
    %2090 = vsyncpa %s2089, 1

</llo_original>
